<compile_context>
chip_gen: v5e
topology: v5e:2x2
jax: 0.10.0
libtpu: 0.0.40
codegen_flags: <defaults>
</compile_context>

<pallas_src>
import functools

import jax
import jax.numpy as jnp
import numpy as np
from jax import lax
from jax.experimental import pallas as pl
from jax.experimental.pallas import tpu as pltpu

H, W = 16, 128          # input spatial size (W on the lane axis)
CIN = 1                 # grayscale input channels
CC = 8                  # classifier conv channels
CO = 8                  # OCR conv channels
K = 4                   # number of OCR models
V = 16                  # OCR vocabulary size

# ---- packed weight-buffer layout (single VMEM input, single DMA) -----------
# Every sub-block starts at a sublane offset that is a multiple of 8.
CONV_ROWS = 9 * CIN * CC + CC   # 72 weight rows (t*C + c) followed by C bias rows
CLF_CONV_OFF = 0                # (CONV_ROWS, 1)
OCR_CONV_OFF = 80               # (CONV_ROWS, K)   model k in column k
CLF_HEAD_W_OFF = 160            # (K, CC)
CLF_HEAD_B_OFF = 168            # (K, 1)
OCR_HEAD_W_OFF = 176            # (K*V, CO)        model k in rows [k*V, (k+1)*V)
OCR_HEAD_B_OFF = 240            # (V, K)           model k in column k
WBUF_ROWS, WBUF_COLS = 256, 8


# --------------------------------------------------------------------------
# Fused Pallas kernel
# --------------------------------------------------------------------------
def _selective_ocr_kernel(img_ref, wbuf_ref, out_ref, *, static_idx):
    f32 = jnp.float32
    img = img_ref[...]                                           # (H, W) f32

    # ---- in-kernel im2col: taps[t][h, w] = img[h+dy, w+dx] (zero padded),
    #      t = (dy+1)*3 + (dx+1).  Row shifts: static zero-row concat.
    #      Column shifts: XLU lane rotate (pltpu.roll) + hoisted edge mask.
    col_idx = lax.broadcasted_iota(jnp.int32, (H, W), 1)

    def shift_rows(a, dy):                       # y[h, :] = a[h+dy, :]
        if dy == 0:
            return a
        if dy > 0:
            return jnp.concatenate([a[dy:, :], jnp.zeros((dy, W), f32)], axis=0)
        return jnp.concatenate([jnp.zeros((-dy, W), f32), a[:dy, :]], axis=0)

    def shift_cols(a, dx):                       # y[:, w] = a[:, w+dx]
        if dx == 0:
            return a
        r = pltpu.roll(a, (-dx) % W, 1)          # lane rotate on the XLU
        keep = (col_idx < W - dx) if dx > 0 else (col_idx >= -dx)
        return jnp.where(keep, r, 0.0)

    taps = []
    for dy in (-1, 0, 1):
        row = shift_rows(img, dy)
        for dx in (-1, 0, 1):
            taps.append(shift_cols(row, dx))     # 9 x (H, W)

    # ---- shared 3x3 conv + ReLU + mean over H; lane-dense (C, W) feature ----
    # wb: (9*n_ch + n_ch, W) with every row constant along lanes;
    # row t*n_ch + c = weight(tap t, channel c), row 9*n_ch + c = bias(c).
    def conv_relu_mean(wb, n_ch):
        rows = []
        for c in range(n_ch):
            acc = wb[9 * n_ch + c:9 * n_ch + c + 1, :] + taps[0] * wb[c:c + 1, :]
            for t in range(1, 9):
                acc = acc + taps[t] * wb[t * n_ch + c:t * n_ch + c + 1, :]
            acc = jnp.maximum(acc, 0.0)                          # (H, W)
            rows.append(jnp.mean(acc, axis=0, keepdims=True))    # (1, W)
        return jnp.concatenate(rows, axis=0)                     # (n_ch, W)

    ocr_conv_blk = wbuf_ref[OCR_CONV_OFF:OCR_CONV_OFF + CONV_ROWS, 0:K]   # (80, K)

    if static_idx is None:
        # Classifier conv -> per-channel totals over W -> model scores -> exact
        # one-hot (first max wins, matching torch.argmax tie-breaking).
        clf_col = wbuf_ref[CLF_CONV_OFF:CLF_CONV_OFF + CONV_ROWS, 0:1]    # (80, 1)
        feat_c = conv_relu_mean(jnp.broadcast_to(clf_col, (CONV_ROWS, W)), CC)
        feat_sum = jnp.sum(feat_c, axis=1, keepdims=True)                 # (CC, 1)
        clf_whT = wbuf_ref[CLF_HEAD_W_OFF:CLF_HEAD_W_OFF + K, 0:CC]       # (K, CC)
        clf_bh = wbuf_ref[CLF_HEAD_B_OFF:CLF_HEAD_B_OFF + K, 0:1]         # (K, 1)
        scores = (jnp.dot(clf_whT, feat_sum, preferred_element_type=f32)
                  + float(W) * clf_bh)                                    # (K, 1)
        smax = jnp.max(scores, axis=0, keepdims=True)                     # (1, 1)
        kk = lax.broadcasted_iota(jnp.int32, (K, 1), 0)
        first = jnp.min(jnp.where(scores == smax, kk, K), axis=0, keepdims=True)
        onehot = (kk == first).astype(f32)                                # (K, 1)

        # Blend the selected model's conv weights BEFORE the conv (single conv
        # instead of K): (80, K) @ (K, W) -> (80, W) with constant rows.
        onehot_b = jnp.broadcast_to(onehot, (K, W))                       # (K, W)
        wb_sel = jnp.dot(ocr_conv_blk, onehot_b, preferred_element_type=f32)

        # Blend the tiny head weights / bias with the exact 0/1 one-hot.
        whT_sel = jnp.zeros((V, CO), f32)
        bh_sel = jnp.zeros((V, 1), f32)
        for k in range(K):
            sel = onehot[k:k + 1, 0:1]                                    # (1, 1)
            whT_sel = whT_sel + sel * wbuf_ref[OCR_HEAD_W_OFF + k * V:
                                               OCR_HEAD_W_OFF + (k + 1) * V, 0:CO]
            bh_sel = bh_sel + sel * wbuf_ref[OCR_HEAD_B_OFF:OCR_HEAD_B_OFF + V,
                                             k:k + 1]
    else:
        # Explicit (host-supplied) model index: selection is static.
        k = static_idx
        wb_sel = jnp.broadcast_to(ocr_conv_blk[:, k:k + 1], (CONV_ROWS, W))
        whT_sel = wbuf_ref[OCR_HEAD_W_OFF + k * V:OCR_HEAD_W_OFF + (k + 1) * V, 0:CO]
        bh_sel = wbuf_ref[OCR_HEAD_B_OFF:OCR_HEAD_B_OFF + V, k:k + 1]

    # Single OCR conv with the blended weights, then the selected head.
    feat_o = conv_relu_mean(wb_sel, CO)                                   # (CO, W)
    out_ref[...] = jnp.dot(whT_sel, feat_o, preferred_element_type=f32) + bh_sel


# --------------------------------------------------------------------------
# Wrapper / parameter packing
# --------------------------------------------------------------------------
def _pack_params(p):
    """Pack ALL weights once into a single (256, 8) f32 buffer (one DMA)."""
    buf = np.zeros((WBUF_ROWS, WBUF_COLS), np.float32)
    # classifier conv: w (9*CIN, CC) flattened to [t*CC + c]; bias (1, CC)
    buf[CLF_CONV_OFF:CLF_CONV_OFF + 9 * CIN * CC, 0] = \
        np.asarray(p['clf_w_conv'], np.float32).reshape(-1)
    buf[CLF_CONV_OFF + 9 * CIN * CC:CLF_CONV_OFF + CONV_ROWS, 0] = \
        np.asarray(p['clf_b_conv'], np.float32).reshape(-1)
    # OCR convs: (K, 9*CIN, CO) / (K, 1, CO) -> one column per model
    wc = np.asarray(p['ocr_w_conv'], np.float32).reshape(K, 9 * CIN * CO)
    bc = np.asarray(p['ocr_b_conv'], np.float32).reshape(K, CO)
    buf[OCR_CONV_OFF:OCR_CONV_OFF + 9 * CIN * CO, :K] = wc.T
    buf[OCR_CONV_OFF + 9 * CIN * CO:OCR_CONV_OFF + CONV_ROWS, :K] = bc.T
    # classifier head: (CC, K) -> (K, CC); bias (1, K) -> (K, 1)
    buf[CLF_HEAD_W_OFF:CLF_HEAD_W_OFF + K, :CC] = \
        np.asarray(p['clf_w_head'], np.float32).T
    buf[CLF_HEAD_B_OFF:CLF_HEAD_B_OFF + K, 0] = \
        np.asarray(p['clf_b_head'], np.float32).reshape(-1)
    # OCR heads: w (K, CO, V) -> per-model (V, CO); b (K, 1, V) -> (V, K)
    wh = np.asarray(p['ocr_w_head'], np.float32)
    for k in range(K):
        buf[OCR_HEAD_W_OFF + k * V:OCR_HEAD_W_OFF + (k + 1) * V, :CO] = wh[k].T
    buf[OCR_HEAD_B_OFF:OCR_HEAD_B_OFF + V, :K] = \
        np.asarray(p['ocr_b_head'], np.float32).reshape(K, V).T
    return jnp.asarray(buf)


def _build_forward(wbuf, static_idx):
    kernel = functools.partial(_selective_ocr_kernel, static_idx=static_idx)
    vmem = pltpu.MemorySpace.VMEM
    call = pl.pallas_call(
        kernel,
        out_shape=jax.ShapeDtypeStruct((V, W), jnp.float32),
        in_specs=[
            pl.BlockSpec(memory_space=vmem),    # img   (H, W)
            pl.BlockSpec(memory_space=vmem),    # wbuf  (256, 8) packed weights
        ],
        out_specs=pl.BlockSpec(memory_space=vmem),
    )

    def fwd(x):
        img = x[0, 0].astype(jnp.float32)                       # (H, W)
        out_vw = call(img, wbuf)                                # (V, W) lane-dense
        return jnp.transpose(out_vw)[None]                      # (1, W, V)

    return jax.jit(fwd)


class SelectiveOCRPallas:
    """Pallas port of ocrd_froc SelectiveOCR.forward (single fused kernel)."""

    def __init__(self, params):
        self.params = params
        self._wbuf = _pack_params(params)
        self._fwd_cache = {}

    def _forward_fn(self, static_idx):
        if static_idx not in self._fwd_cache:
            self._fwd_cache[static_idx] = _build_forward(self._wbuf, static_idx)
        return self._fwd_cache[static_idx]

    def __call__(self, x, model_idx=None):
        if x.shape[0] != 1:
            raise Exception('SelectiveOCR cannot work on batches, sorry')
        # NB: replicates torch `if not model_idx:` truthiness (None or 0 -> classify).
        if not model_idx:
            return self._forward_fn(None)(x)
        # `model_idx if model_idx in self.models else 0` -> clamp to valid keys [0, K)
        idx = int(model_idx) if 0 <= int(model_idx) < K else 0
        return self._forward_fn(idx)(x)


# --------------------------------------------------------------------------
# Deterministic synthetic parameters + pure-numpy reference
# --------------------------------------------------------------------------
def init_params():
    ks = jax.random.split(jax.random.PRNGKey(42), 8)

    def rnd(k, shape, scale=0.1):
        return (scale * jax.random.normal(k, shape)).astype(jnp.float32)

    return dict(
        clf_w_conv=rnd(ks[0], (9 * CIN, CC)),
        clf_b_conv=rnd(ks[1], (1, CC)),
        clf_w_head=rnd(ks[2], (CC, K)),
        clf_b_head=rnd(ks[3], (1, K)),
        ocr_w_conv=rnd(ks[4], (K, 9 * CIN, CO)),
        ocr_b_conv=rnd(ks[5], (K, 1, CO)),
        ocr_w_head=rnd(ks[6], (K, CO, V)),
        ocr_b_head=rnd(ks[7], (K, 1, V)),
    )


def _extract_patches_3x3_np(img):
    """img [H, W] -> im2col patches [H, W, 9] for a 3x3 'same' conv (reference only)."""
    h, w = img.shape
    xp = np.pad(np.asarray(img, np.float32), ((1, 1), (1, 1)))
    cols = [xp[dh:dh + h, dw:dw + w] for dh in range(3) for dw in range(3)]
    return np.stack(cols, axis=-1)


def reference_forward(x, p, model_idx=None):
    patches = _extract_patches_3x3_np(np.asarray(x[0, 0]))

    def conv_mean(w, b):
        y = np.maximum(patches.reshape(H * W, 9 * CIN) @ np.asarray(w)
                       + np.asarray(b), 0.0)
        return y.reshape(H, W, -1).mean(axis=0)                 # (W, C)

    if not model_idx:
        feat = conv_mean(p['clf_w_conv'], p['clf_b_conv'])
        scores = (feat @ np.asarray(p['clf_w_head'])
                  + np.asarray(p['clf_b_head'])).sum(axis=0)
        model_idx = int(np.argmax(scores))
    model_idx = model_idx if 0 <= model_idx < K else 0
    feat = conv_mean(p['ocr_w_conv'][model_idx], p['ocr_b_conv'][model_idx])
    out = feat @ np.asarray(p['ocr_w_head'][model_idx]) \
        + np.asarray(p['ocr_b_head'][model_idx])
    return out[None]                                            # (1, W, V)


if __name__ == "__main__":
    x = jax.random.normal(jax.random.PRNGKey(0), (1, CIN, H, W), dtype=jnp.float32)

    params = init_params()
    model = SelectiveOCRPallas(params)

    # Classifier-selected path (model_idx=None).
    out = jax.block_until_ready(model(x))
    ref = reference_forward(x, params)
    np.testing.assert_allclose(np.asarray(out), ref, rtol=1e-4, atol=1e-4)

    # Explicit model-index path.
    out2 = jax.block_until_ready(model(x, 2))
    ref2 = reference_forward(x, params, 2)
    np.testing.assert_allclose(np.asarray(out2), ref2, rtol=1e-4, atol=1e-4)

    print("KERNEL_OK")
</pallas_src>

<mosaic_0001>
module attributes {stable_mosaic.version = 11 : i64} {
  func.func @_selective_ocr_kernel(%arg0: memref<16x128xf32, #tpu.memory_space<vmem>>, %arg1: memref<256x8xf32, #tpu.memory_space<vmem>>, %arg2: memref<16x128xf32, #tpu.memory_space<vmem>>) attributes {dimension_semantics = [], scalar_prefetch = 0 : i64, scratch_operands = 0 : i64, tpu.core_type = #tpu.core_type<tc>} {
    %c0 = arith.constant 0 : index
    %c0_0 = arith.constant 0 : index
    %0 = vector.load %arg0[%c0, %c0_0] : memref<16x128xf32, #tpu.memory_space<vmem>>, vector<16x128xf32>
    %1 = tpu.iota {dimensions = array<i32: 1>} : vector<16x128xi32>
    %cst = arith.constant 0.000000e+00 : f32
    %2 = vector.broadcast %cst : f32 to vector<1x128xf32>
    %3 = vector.extract_strided_slice %0 {offsets = [0, 0], sizes = [15, 128], strides = [1, 1]} : vector<16x128xf32> to vector<15x128xf32>
    %4 = tpu.concatenate %2, %3 in 0 : vector<1x128xf32>, vector<15x128xf32> -> vector<16x128xf32>
    %c1_i32 = arith.constant 1 : i32
    %5 = tpu.dynamic_rotate %4 by %c1_i32 dim 1 : vector<16x128xf32>, i32 -> vector<16x128xf32>
    %c1_i32_1 = arith.constant 1 : i32
    %6 = vector.broadcast %c1_i32_1 : i32 to vector<16x128xi32>
    %7 = arith.cmpi sge, %1, %6 : vector<16x128xi32>
    %cst_2 = arith.constant 0.000000e+00 : f32
    %8 = vector.broadcast %cst_2 : f32 to vector<16x128xf32>
    %9 = arith.select %7, %5, %8 : vector<16x128xi1>, vector<16x128xf32>
    %c127_i32 = arith.constant 127 : i32
    %10 = tpu.dynamic_rotate %4 by %c127_i32 dim 1 : vector<16x128xf32>, i32 -> vector<16x128xf32>
    %c127_i32_3 = arith.constant 127 : i32
    %11 = vector.broadcast %c127_i32_3 : i32 to vector<16x128xi32>
    %12 = arith.cmpi slt, %1, %11 : vector<16x128xi32>
    %cst_4 = arith.constant 0.000000e+00 : f32
    %13 = vector.broadcast %cst_4 : f32 to vector<16x128xf32>
    %14 = arith.select %12, %10, %13 : vector<16x128xi1>, vector<16x128xf32>
    %c1_i32_5 = arith.constant 1 : i32
    %15 = tpu.dynamic_rotate %0 by %c1_i32_5 dim 1 : vector<16x128xf32>, i32 -> vector<16x128xf32>
    %c1_i32_6 = arith.constant 1 : i32
    %16 = vector.broadcast %c1_i32_6 : i32 to vector<16x128xi32>
    %17 = arith.cmpi sge, %1, %16 : vector<16x128xi32>
    %cst_7 = arith.constant 0.000000e+00 : f32
    %18 = vector.broadcast %cst_7 : f32 to vector<16x128xf32>
    %19 = arith.select %17, %15, %18 : vector<16x128xi1>, vector<16x128xf32>
    %c127_i32_8 = arith.constant 127 : i32
    %20 = tpu.dynamic_rotate %0 by %c127_i32_8 dim 1 : vector<16x128xf32>, i32 -> vector<16x128xf32>
    %c127_i32_9 = arith.constant 127 : i32
    %21 = vector.broadcast %c127_i32_9 : i32 to vector<16x128xi32>
    %22 = arith.cmpi slt, %1, %21 : vector<16x128xi32>
    %cst_10 = arith.constant 0.000000e+00 : f32
    %23 = vector.broadcast %cst_10 : f32 to vector<16x128xf32>
    %24 = arith.select %22, %20, %23 : vector<16x128xi1>, vector<16x128xf32>
    %25 = vector.extract_strided_slice %0 {offsets = [1, 0], sizes = [15, 128], strides = [1, 1]} : vector<16x128xf32> to vector<15x128xf32>
    %cst_11 = arith.constant 0.000000e+00 : f32
    %26 = vector.broadcast %cst_11 : f32 to vector<1x128xf32>
    %27 = tpu.concatenate %25, %26 in 0 : vector<15x128xf32>, vector<1x128xf32> -> vector<16x128xf32>
    %c1_i32_12 = arith.constant 1 : i32
    %28 = tpu.dynamic_rotate %27 by %c1_i32_12 dim 1 : vector<16x128xf32>, i32 -> vector<16x128xf32>
    %c1_i32_13 = arith.constant 1 : i32
    %29 = vector.broadcast %c1_i32_13 : i32 to vector<16x128xi32>
    %30 = arith.cmpi sge, %1, %29 : vector<16x128xi32>
    %cst_14 = arith.constant 0.000000e+00 : f32
    %31 = vector.broadcast %cst_14 : f32 to vector<16x128xf32>
    %32 = arith.select %30, %28, %31 : vector<16x128xi1>, vector<16x128xf32>
    %c127_i32_15 = arith.constant 127 : i32
    %33 = tpu.dynamic_rotate %27 by %c127_i32_15 dim 1 : vector<16x128xf32>, i32 -> vector<16x128xf32>
    %c127_i32_16 = arith.constant 127 : i32
    %34 = vector.broadcast %c127_i32_16 : i32 to vector<16x128xi32>
    %35 = arith.cmpi slt, %1, %34 : vector<16x128xi32>
    %cst_17 = arith.constant 0.000000e+00 : f32
    %36 = vector.broadcast %cst_17 : f32 to vector<16x128xf32>
    %37 = arith.select %35, %33, %36 : vector<16x128xi1>, vector<16x128xf32>
    %c80 = arith.constant 80 : index
    %c0_18 = arith.constant 0 : index
    %38 = vector.load %arg1[%c80, %c0_18] : memref<256x8xf32, #tpu.memory_space<vmem>>, vector<80x4xf32>
    %c0_19 = arith.constant 0 : index
    %c0_20 = arith.constant 0 : index
    %39 = vector.load %arg1[%c0_19, %c0_20] : memref<256x8xf32, #tpu.memory_space<vmem>>, vector<80x1xf32>
    %40 = vector.shape_cast %39 : vector<80x1xf32> to vector<80x1xf32>
    %41 = vector.broadcast %40 : vector<80x1xf32> to vector<80x128xf32>
    %42 = vector.extract_strided_slice %41 {offsets = [72, 0], sizes = [1, 128], strides = [1, 1]} : vector<80x128xf32> to vector<1x128xf32>
    %43 = vector.extract_strided_slice %41 {offsets = [0, 0], sizes = [1, 128], strides = [1, 1]} : vector<80x128xf32> to vector<1x128xf32>
    %44 = vector.broadcast %43 : vector<1x128xf32> to vector<16x128xf32>
    %45 = arith.mulf %9, %44 : vector<16x128xf32>
    %46 = vector.broadcast %42 : vector<1x128xf32> to vector<16x128xf32>
    %47 = arith.addf %46, %45 : vector<16x128xf32>
    %48 = vector.extract_strided_slice %41 {offsets = [8, 0], sizes = [1, 128], strides = [1, 1]} : vector<80x128xf32> to vector<1x128xf32>
    %49 = vector.broadcast %48 : vector<1x128xf32> to vector<16x128xf32>
    %50 = arith.mulf %4, %49 : vector<16x128xf32>
    %51 = arith.addf %47, %50 : vector<16x128xf32>
    %52 = vector.extract_strided_slice %41 {offsets = [16, 0], sizes = [1, 128], strides = [1, 1]} : vector<80x128xf32> to vector<1x128xf32>
    %53 = vector.broadcast %52 : vector<1x128xf32> to vector<16x128xf32>
    %54 = arith.mulf %14, %53 : vector<16x128xf32>
    %55 = arith.addf %51, %54 : vector<16x128xf32>
    %56 = vector.extract_strided_slice %41 {offsets = [24, 0], sizes = [1, 128], strides = [1, 1]} : vector<80x128xf32> to vector<1x128xf32>
    %57 = vector.broadcast %56 : vector<1x128xf32> to vector<16x128xf32>
    %58 = arith.mulf %19, %57 : vector<16x128xf32>
    %59 = arith.addf %55, %58 : vector<16x128xf32>
    %60 = vector.extract_strided_slice %41 {offsets = [32, 0], sizes = [1, 128], strides = [1, 1]} : vector<80x128xf32> to vector<1x128xf32>
    %61 = vector.broadcast %60 : vector<1x128xf32> to vector<16x128xf32>
    %62 = arith.mulf %0, %61 : vector<16x128xf32>
    %63 = arith.addf %59, %62 : vector<16x128xf32>
    %64 = vector.extract_strided_slice %41 {offsets = [40, 0], sizes = [1, 128], strides = [1, 1]} : vector<80x128xf32> to vector<1x128xf32>
    %65 = vector.broadcast %64 : vector<1x128xf32> to vector<16x128xf32>
    %66 = arith.mulf %24, %65 : vector<16x128xf32>
    %67 = arith.addf %63, %66 : vector<16x128xf32>
    %68 = vector.extract_strided_slice %41 {offsets = [48, 0], sizes = [1, 128], strides = [1, 1]} : vector<80x128xf32> to vector<1x128xf32>
    %69 = vector.broadcast %68 : vector<1x128xf32> to vector<16x128xf32>
    %70 = arith.mulf %32, %69 : vector<16x128xf32>
    %71 = arith.addf %67, %70 : vector<16x128xf32>
    %72 = vector.extract_strided_slice %41 {offsets = [56, 0], sizes = [1, 128], strides = [1, 1]} : vector<80x128xf32> to vector<1x128xf32>
    %73 = vector.broadcast %72 : vector<1x128xf32> to vector<16x128xf32>
    %74 = arith.mulf %27, %73 : vector<16x128xf32>
    %75 = arith.addf %71, %74 : vector<16x128xf32>
    %76 = vector.extract_strided_slice %41 {offsets = [64, 0], sizes = [1, 128], strides = [1, 1]} : vector<80x128xf32> to vector<1x128xf32>
    %77 = vector.broadcast %76 : vector<1x128xf32> to vector<16x128xf32>
    %78 = arith.mulf %37, %77 : vector<16x128xf32>
    %79 = arith.addf %75, %78 : vector<16x128xf32>
    %cst_21 = arith.constant 0.000000e+00 : f32
    %80 = vector.broadcast %cst_21 : f32 to vector<16x128xf32>
    %81 = arith.maximumf %79, %80 : vector<16x128xf32>
    %cst_22 = arith.constant dense<0.000000e+00> : vector<128xf32>
    %82 = vector.multi_reduction <add>, %81, %cst_22 [0] : vector<16x128xf32> to vector<128xf32>
    %83 = vector.shape_cast %82 : vector<128xf32> to vector<1x128xf32>
    %cst_23 = arith.constant 1.600000e+01 : f32
    %84 = vector.broadcast %cst_23 : f32 to vector<1x128xf32>
    %85 = arith.divf %83, %84 : vector<1x128xf32>
    %86 = vector.extract_strided_slice %41 {offsets = [73, 0], sizes = [1, 128], strides = [1, 1]} : vector<80x128xf32> to vector<1x128xf32>
    %87 = vector.extract_strided_slice %41 {offsets = [1, 0], sizes = [1, 128], strides = [1, 1]} : vector<80x128xf32> to vector<1x128xf32>
    %88 = vector.broadcast %87 : vector<1x128xf32> to vector<16x128xf32>
    %89 = arith.mulf %9, %88 : vector<16x128xf32>
    %90 = vector.broadcast %86 : vector<1x128xf32> to vector<16x128xf32>
    %91 = arith.addf %90, %89 : vector<16x128xf32>
    %92 = vector.extract_strided_slice %41 {offsets = [9, 0], sizes = [1, 128], strides = [1, 1]} : vector<80x128xf32> to vector<1x128xf32>
    %93 = vector.broadcast %92 : vector<1x128xf32> to vector<16x128xf32>
    %94 = arith.mulf %4, %93 : vector<16x128xf32>
    %95 = arith.addf %91, %94 : vector<16x128xf32>
    %96 = vector.extract_strided_slice %41 {offsets = [17, 0], sizes = [1, 128], strides = [1, 1]} : vector<80x128xf32> to vector<1x128xf32>
    %97 = vector.broadcast %96 : vector<1x128xf32> to vector<16x128xf32>
    %98 = arith.mulf %14, %97 : vector<16x128xf32>
    %99 = arith.addf %95, %98 : vector<16x128xf32>
    %100 = vector.extract_strided_slice %41 {offsets = [25, 0], sizes = [1, 128], strides = [1, 1]} : vector<80x128xf32> to vector<1x128xf32>
    %101 = vector.broadcast %100 : vector<1x128xf32> to vector<16x128xf32>
    %102 = arith.mulf %19, %101 : vector<16x128xf32>
    %103 = arith.addf %99, %102 : vector<16x128xf32>
    %104 = vector.extract_strided_slice %41 {offsets = [33, 0], sizes = [1, 128], strides = [1, 1]} : vector<80x128xf32> to vector<1x128xf32>
    %105 = vector.broadcast %104 : vector<1x128xf32> to vector<16x128xf32>
    %106 = arith.mulf %0, %105 : vector<16x128xf32>
    %107 = arith.addf %103, %106 : vector<16x128xf32>
    %108 = vector.extract_strided_slice %41 {offsets = [41, 0], sizes = [1, 128], strides = [1, 1]} : vector<80x128xf32> to vector<1x128xf32>
    %109 = vector.broadcast %108 : vector<1x128xf32> to vector<16x128xf32>
    %110 = arith.mulf %24, %109 : vector<16x128xf32>
    %111 = arith.addf %107, %110 : vector<16x128xf32>
    %112 = vector.extract_strided_slice %41 {offsets = [49, 0], sizes = [1, 128], strides = [1, 1]} : vector<80x128xf32> to vector<1x128xf32>
    %113 = vector.broadcast %112 : vector<1x128xf32> to vector<16x128xf32>
    %114 = arith.mulf %32, %113 : vector<16x128xf32>
    %115 = arith.addf %111, %114 : vector<16x128xf32>
    %116 = vector.extract_strided_slice %41 {offsets = [57, 0], sizes = [1, 128], strides = [1, 1]} : vector<80x128xf32> to vector<1x128xf32>
    %117 = vector.broadcast %116 : vector<1x128xf32> to vector<16x128xf32>
    %118 = arith.mulf %27, %117 : vector<16x128xf32>
    %119 = arith.addf %115, %118 : vector<16x128xf32>
    %120 = vector.extract_strided_slice %41 {offsets = [65, 0], sizes = [1, 128], strides = [1, 1]} : vector<80x128xf32> to vector<1x128xf32>
    %121 = vector.broadcast %120 : vector<1x128xf32> to vector<16x128xf32>
    %122 = arith.mulf %37, %121 : vector<16x128xf32>
    %123 = arith.addf %119, %122 : vector<16x128xf32>
    %cst_24 = arith.constant 0.000000e+00 : f32
    %124 = vector.broadcast %cst_24 : f32 to vector<16x128xf32>
    %125 = arith.maximumf %123, %124 : vector<16x128xf32>
    %cst_25 = arith.constant dense<0.000000e+00> : vector<128xf32>
    %126 = vector.multi_reduction <add>, %125, %cst_25 [0] : vector<16x128xf32> to vector<128xf32>
    %127 = vector.shape_cast %126 : vector<128xf32> to vector<1x128xf32>
    %cst_26 = arith.constant 1.600000e+01 : f32
    %128 = vector.broadcast %cst_26 : f32 to vector<1x128xf32>
    %129 = arith.divf %127, %128 : vector<1x128xf32>
    %130 = vector.extract_strided_slice %41 {offsets = [74, 0], sizes = [1, 128], strides = [1, 1]} : vector<80x128xf32> to vector<1x128xf32>
    %131 = vector.extract_strided_slice %41 {offsets = [2, 0], sizes = [1, 128], strides = [1, 1]} : vector<80x128xf32> to vector<1x128xf32>
    %132 = vector.broadcast %131 : vector<1x128xf32> to vector<16x128xf32>
    %133 = arith.mulf %9, %132 : vector<16x128xf32>
    %134 = vector.broadcast %130 : vector<1x128xf32> to vector<16x128xf32>
    %135 = arith.addf %134, %133 : vector<16x128xf32>
    %136 = vector.extract_strided_slice %41 {offsets = [10, 0], sizes = [1, 128], strides = [1, 1]} : vector<80x128xf32> to vector<1x128xf32>
    %137 = vector.broadcast %136 : vector<1x128xf32> to vector<16x128xf32>
    %138 = arith.mulf %4, %137 : vector<16x128xf32>
    %139 = arith.addf %135, %138 : vector<16x128xf32>
    %140 = vector.extract_strided_slice %41 {offsets = [18, 0], sizes = [1, 128], strides = [1, 1]} : vector<80x128xf32> to vector<1x128xf32>
    %141 = vector.broadcast %140 : vector<1x128xf32> to vector<16x128xf32>
    %142 = arith.mulf %14, %141 : vector<16x128xf32>
    %143 = arith.addf %139, %142 : vector<16x128xf32>
    %144 = vector.extract_strided_slice %41 {offsets = [26, 0], sizes = [1, 128], strides = [1, 1]} : vector<80x128xf32> to vector<1x128xf32>
    %145 = vector.broadcast %144 : vector<1x128xf32> to vector<16x128xf32>
    %146 = arith.mulf %19, %145 : vector<16x128xf32>
    %147 = arith.addf %143, %146 : vector<16x128xf32>
    %148 = vector.extract_strided_slice %41 {offsets = [34, 0], sizes = [1, 128], strides = [1, 1]} : vector<80x128xf32> to vector<1x128xf32>
    %149 = vector.broadcast %148 : vector<1x128xf32> to vector<16x128xf32>
    %150 = arith.mulf %0, %149 : vector<16x128xf32>
    %151 = arith.addf %147, %150 : vector<16x128xf32>
    %152 = vector.extract_strided_slice %41 {offsets = [42, 0], sizes = [1, 128], strides = [1, 1]} : vector<80x128xf32> to vector<1x128xf32>
    %153 = vector.broadcast %152 : vector<1x128xf32> to vector<16x128xf32>
    %154 = arith.mulf %24, %153 : vector<16x128xf32>
    %155 = arith.addf %151, %154 : vector<16x128xf32>
    %156 = vector.extract_strided_slice %41 {offsets = [50, 0], sizes = [1, 128], strides = [1, 1]} : vector<80x128xf32> to vector<1x128xf32>
    %157 = vector.broadcast %156 : vector<1x128xf32> to vector<16x128xf32>
    %158 = arith.mulf %32, %157 : vector<16x128xf32>
    %159 = arith.addf %155, %158 : vector<16x128xf32>
    %160 = vector.extract_strided_slice %41 {offsets = [58, 0], sizes = [1, 128], strides = [1, 1]} : vector<80x128xf32> to vector<1x128xf32>
    %161 = vector.broadcast %160 : vector<1x128xf32> to vector<16x128xf32>
    %162 = arith.mulf %27, %161 : vector<16x128xf32>
    %163 = arith.addf %159, %162 : vector<16x128xf32>
    %164 = vector.extract_strided_slice %41 {offsets = [66, 0], sizes = [1, 128], strides = [1, 1]} : vector<80x128xf32> to vector<1x128xf32>
    %165 = vector.broadcast %164 : vector<1x128xf32> to vector<16x128xf32>
    %166 = arith.mulf %37, %165 : vector<16x128xf32>
    %167 = arith.addf %163, %166 : vector<16x128xf32>
    %cst_27 = arith.constant 0.000000e+00 : f32
    %168 = vector.broadcast %cst_27 : f32 to vector<16x128xf32>
    %169 = arith.maximumf %167, %168 : vector<16x128xf32>
    %cst_28 = arith.constant dense<0.000000e+00> : vector<128xf32>
    %170 = vector.multi_reduction <add>, %169, %cst_28 [0] : vector<16x128xf32> to vector<128xf32>
    %171 = vector.shape_cast %170 : vector<128xf32> to vector<1x128xf32>
    %cst_29 = arith.constant 1.600000e+01 : f32
    %172 = vector.broadcast %cst_29 : f32 to vector<1x128xf32>
    %173 = arith.divf %171, %172 : vector<1x128xf32>
    %174 = vector.extract_strided_slice %41 {offsets = [75, 0], sizes = [1, 128], strides = [1, 1]} : vector<80x128xf32> to vector<1x128xf32>
    %175 = vector.extract_strided_slice %41 {offsets = [3, 0], sizes = [1, 128], strides = [1, 1]} : vector<80x128xf32> to vector<1x128xf32>
    %176 = vector.broadcast %175 : vector<1x128xf32> to vector<16x128xf32>
    %177 = arith.mulf %9, %176 : vector<16x128xf32>
    %178 = vector.broadcast %174 : vector<1x128xf32> to vector<16x128xf32>
    %179 = arith.addf %178, %177 : vector<16x128xf32>
    %180 = vector.extract_strided_slice %41 {offsets = [11, 0], sizes = [1, 128], strides = [1, 1]} : vector<80x128xf32> to vector<1x128xf32>
    %181 = vector.broadcast %180 : vector<1x128xf32> to vector<16x128xf32>
    %182 = arith.mulf %4, %181 : vector<16x128xf32>
    %183 = arith.addf %179, %182 : vector<16x128xf32>
    %184 = vector.extract_strided_slice %41 {offsets = [19, 0], sizes = [1, 128], strides = [1, 1]} : vector<80x128xf32> to vector<1x128xf32>
    %185 = vector.broadcast %184 : vector<1x128xf32> to vector<16x128xf32>
    %186 = arith.mulf %14, %185 : vector<16x128xf32>
    %187 = arith.addf %183, %186 : vector<16x128xf32>
    %188 = vector.extract_strided_slice %41 {offsets = [27, 0], sizes = [1, 128], strides = [1, 1]} : vector<80x128xf32> to vector<1x128xf32>
    %189 = vector.broadcast %188 : vector<1x128xf32> to vector<16x128xf32>
    %190 = arith.mulf %19, %189 : vector<16x128xf32>
    %191 = arith.addf %187, %190 : vector<16x128xf32>
    %192 = vector.extract_strided_slice %41 {offsets = [35, 0], sizes = [1, 128], strides = [1, 1]} : vector<80x128xf32> to vector<1x128xf32>
    %193 = vector.broadcast %192 : vector<1x128xf32> to vector<16x128xf32>
    %194 = arith.mulf %0, %193 : vector<16x128xf32>
    %195 = arith.addf %191, %194 : vector<16x128xf32>
    %196 = vector.extract_strided_slice %41 {offsets = [43, 0], sizes = [1, 128], strides = [1, 1]} : vector<80x128xf32> to vector<1x128xf32>
    %197 = vector.broadcast %196 : vector<1x128xf32> to vector<16x128xf32>
    %198 = arith.mulf %24, %197 : vector<16x128xf32>
    %199 = arith.addf %195, %198 : vector<16x128xf32>
    %200 = vector.extract_strided_slice %41 {offsets = [51, 0], sizes = [1, 128], strides = [1, 1]} : vector<80x128xf32> to vector<1x128xf32>
    %201 = vector.broadcast %200 : vector<1x128xf32> to vector<16x128xf32>
    %202 = arith.mulf %32, %201 : vector<16x128xf32>
    %203 = arith.addf %199, %202 : vector<16x128xf32>
    %204 = vector.extract_strided_slice %41 {offsets = [59, 0], sizes = [1, 128], strides = [1, 1]} : vector<80x128xf32> to vector<1x128xf32>
    %205 = vector.broadcast %204 : vector<1x128xf32> to vector<16x128xf32>
    %206 = arith.mulf %27, %205 : vector<16x128xf32>
    %207 = arith.addf %203, %206 : vector<16x128xf32>
    %208 = vector.extract_strided_slice %41 {offsets = [67, 0], sizes = [1, 128], strides = [1, 1]} : vector<80x128xf32> to vector<1x128xf32>
    %209 = vector.broadcast %208 : vector<1x128xf32> to vector<16x128xf32>
    %210 = arith.mulf %37, %209 : vector<16x128xf32>
    %211 = arith.addf %207, %210 : vector<16x128xf32>
    %cst_30 = arith.constant 0.000000e+00 : f32
    %212 = vector.broadcast %cst_30 : f32 to vector<16x128xf32>
    %213 = arith.maximumf %211, %212 : vector<16x128xf32>
    %cst_31 = arith.constant dense<0.000000e+00> : vector<128xf32>
    %214 = vector.multi_reduction <add>, %213, %cst_31 [0] : vector<16x128xf32> to vector<128xf32>
    %215 = vector.shape_cast %214 : vector<128xf32> to vector<1x128xf32>
    %cst_32 = arith.constant 1.600000e+01 : f32
    %216 = vector.broadcast %cst_32 : f32 to vector<1x128xf32>
    %217 = arith.divf %215, %216 : vector<1x128xf32>
    %218 = vector.extract_strided_slice %41 {offsets = [76, 0], sizes = [1, 128], strides = [1, 1]} : vector<80x128xf32> to vector<1x128xf32>
    %219 = vector.extract_strided_slice %41 {offsets = [4, 0], sizes = [1, 128], strides = [1, 1]} : vector<80x128xf32> to vector<1x128xf32>
    %220 = vector.broadcast %219 : vector<1x128xf32> to vector<16x128xf32>
    %221 = arith.mulf %9, %220 : vector<16x128xf32>
    %222 = vector.broadcast %218 : vector<1x128xf32> to vector<16x128xf32>
    %223 = arith.addf %222, %221 : vector<16x128xf32>
    %224 = vector.extract_strided_slice %41 {offsets = [12, 0], sizes = [1, 128], strides = [1, 1]} : vector<80x128xf32> to vector<1x128xf32>
    %225 = vector.broadcast %224 : vector<1x128xf32> to vector<16x128xf32>
    %226 = arith.mulf %4, %225 : vector<16x128xf32>
    %227 = arith.addf %223, %226 : vector<16x128xf32>
    %228 = vector.extract_strided_slice %41 {offsets = [20, 0], sizes = [1, 128], strides = [1, 1]} : vector<80x128xf32> to vector<1x128xf32>
    %229 = vector.broadcast %228 : vector<1x128xf32> to vector<16x128xf32>
    %230 = arith.mulf %14, %229 : vector<16x128xf32>
    %231 = arith.addf %227, %230 : vector<16x128xf32>
    %232 = vector.extract_strided_slice %41 {offsets = [28, 0], sizes = [1, 128], strides = [1, 1]} : vector<80x128xf32> to vector<1x128xf32>
    %233 = vector.broadcast %232 : vector<1x128xf32> to vector<16x128xf32>
    %234 = arith.mulf %19, %233 : vector<16x128xf32>
    %235 = arith.addf %231, %234 : vector<16x128xf32>
    %236 = vector.extract_strided_slice %41 {offsets = [36, 0], sizes = [1, 128], strides = [1, 1]} : vector<80x128xf32> to vector<1x128xf32>
    %237 = vector.broadcast %236 : vector<1x128xf32> to vector<16x128xf32>
    %238 = arith.mulf %0, %237 : vector<16x128xf32>
    %239 = arith.addf %235, %238 : vector<16x128xf32>
    %240 = vector.extract_strided_slice %41 {offsets = [44, 0], sizes = [1, 128], strides = [1, 1]} : vector<80x128xf32> to vector<1x128xf32>
    %241 = vector.broadcast %240 : vector<1x128xf32> to vector<16x128xf32>
    %242 = arith.mulf %24, %241 : vector<16x128xf32>
    %243 = arith.addf %239, %242 : vector<16x128xf32>
    %244 = vector.extract_strided_slice %41 {offsets = [52, 0], sizes = [1, 128], strides = [1, 1]} : vector<80x128xf32> to vector<1x128xf32>
    %245 = vector.broadcast %244 : vector<1x128xf32> to vector<16x128xf32>
    %246 = arith.mulf %32, %245 : vector<16x128xf32>
    %247 = arith.addf %243, %246 : vector<16x128xf32>
    %248 = vector.extract_strided_slice %41 {offsets = [60, 0], sizes = [1, 128], strides = [1, 1]} : vector<80x128xf32> to vector<1x128xf32>
    %249 = vector.broadcast %248 : vector<1x128xf32> to vector<16x128xf32>
    %250 = arith.mulf %27, %249 : vector<16x128xf32>
    %251 = arith.addf %247, %250 : vector<16x128xf32>
    %252 = vector.extract_strided_slice %41 {offsets = [68, 0], sizes = [1, 128], strides = [1, 1]} : vector<80x128xf32> to vector<1x128xf32>
    %253 = vector.broadcast %252 : vector<1x128xf32> to vector<16x128xf32>
    %254 = arith.mulf %37, %253 : vector<16x128xf32>
    %255 = arith.addf %251, %254 : vector<16x128xf32>
    %cst_33 = arith.constant 0.000000e+00 : f32
    %256 = vector.broadcast %cst_33 : f32 to vector<16x128xf32>
    %257 = arith.maximumf %255, %256 : vector<16x128xf32>
    %cst_34 = arith.constant dense<0.000000e+00> : vector<128xf32>
    %258 = vector.multi_reduction <add>, %257, %cst_34 [0] : vector<16x128xf32> to vector<128xf32>
    %259 = vector.shape_cast %258 : vector<128xf32> to vector<1x128xf32>
    %cst_35 = arith.constant 1.600000e+01 : f32
    %260 = vector.broadcast %cst_35 : f32 to vector<1x128xf32>
    %261 = arith.divf %259, %260 : vector<1x128xf32>
    %262 = vector.extract_strided_slice %41 {offsets = [77, 0], sizes = [1, 128], strides = [1, 1]} : vector<80x128xf32> to vector<1x128xf32>
    %263 = vector.extract_strided_slice %41 {offsets = [5, 0], sizes = [1, 128], strides = [1, 1]} : vector<80x128xf32> to vector<1x128xf32>
    %264 = vector.broadcast %263 : vector<1x128xf32> to vector<16x128xf32>
    %265 = arith.mulf %9, %264 : vector<16x128xf32>
    %266 = vector.broadcast %262 : vector<1x128xf32> to vector<16x128xf32>
    %267 = arith.addf %266, %265 : vector<16x128xf32>
    %268 = vector.extract_strided_slice %41 {offsets = [13, 0], sizes = [1, 128], strides = [1, 1]} : vector<80x128xf32> to vector<1x128xf32>
    %269 = vector.broadcast %268 : vector<1x128xf32> to vector<16x128xf32>
    %270 = arith.mulf %4, %269 : vector<16x128xf32>
    %271 = arith.addf %267, %270 : vector<16x128xf32>
    %272 = vector.extract_strided_slice %41 {offsets = [21, 0], sizes = [1, 128], strides = [1, 1]} : vector<80x128xf32> to vector<1x128xf32>
    %273 = vector.broadcast %272 : vector<1x128xf32> to vector<16x128xf32>
    %274 = arith.mulf %14, %273 : vector<16x128xf32>
    %275 = arith.addf %271, %274 : vector<16x128xf32>
    %276 = vector.extract_strided_slice %41 {offsets = [29, 0], sizes = [1, 128], strides = [1, 1]} : vector<80x128xf32> to vector<1x128xf32>
    %277 = vector.broadcast %276 : vector<1x128xf32> to vector<16x128xf32>
    %278 = arith.mulf %19, %277 : vector<16x128xf32>
    %279 = arith.addf %275, %278 : vector<16x128xf32>
    %280 = vector.extract_strided_slice %41 {offsets = [37, 0], sizes = [1, 128], strides = [1, 1]} : vector<80x128xf32> to vector<1x128xf32>
    %281 = vector.broadcast %280 : vector<1x128xf32> to vector<16x128xf32>
    %282 = arith.mulf %0, %281 : vector<16x128xf32>
    %283 = arith.addf %279, %282 : vector<16x128xf32>
    %284 = vector.extract_strided_slice %41 {offsets = [45, 0], sizes = [1, 128], strides = [1, 1]} : vector<80x128xf32> to vector<1x128xf32>
    %285 = vector.broadcast %284 : vector<1x128xf32> to vector<16x128xf32>
    %286 = arith.mulf %24, %285 : vector<16x128xf32>
    %287 = arith.addf %283, %286 : vector<16x128xf32>
    %288 = vector.extract_strided_slice %41 {offsets = [53, 0], sizes = [1, 128], strides = [1, 1]} : vector<80x128xf32> to vector<1x128xf32>
    %289 = vector.broadcast %288 : vector<1x128xf32> to vector<16x128xf32>
    %290 = arith.mulf %32, %289 : vector<16x128xf32>
    %291 = arith.addf %287, %290 : vector<16x128xf32>
    %292 = vector.extract_strided_slice %41 {offsets = [61, 0], sizes = [1, 128], strides = [1, 1]} : vector<80x128xf32> to vector<1x128xf32>
    %293 = vector.broadcast %292 : vector<1x128xf32> to vector<16x128xf32>
    %294 = arith.mulf %27, %293 : vector<16x128xf32>
    %295 = arith.addf %291, %294 : vector<16x128xf32>
    %296 = vector.extract_strided_slice %41 {offsets = [69, 0], sizes = [1, 128], strides = [1, 1]} : vector<80x128xf32> to vector<1x128xf32>
    %297 = vector.broadcast %296 : vector<1x128xf32> to vector<16x128xf32>
    %298 = arith.mulf %37, %297 : vector<16x128xf32>
    %299 = arith.addf %295, %298 : vector<16x128xf32>
    %cst_36 = arith.constant 0.000000e+00 : f32
    %300 = vector.broadcast %cst_36 : f32 to vector<16x128xf32>
    %301 = arith.maximumf %299, %300 : vector<16x128xf32>
    %cst_37 = arith.constant dense<0.000000e+00> : vector<128xf32>
    %302 = vector.multi_reduction <add>, %301, %cst_37 [0] : vector<16x128xf32> to vector<128xf32>
    %303 = vector.shape_cast %302 : vector<128xf32> to vector<1x128xf32>
    %cst_38 = arith.constant 1.600000e+01 : f32
    %304 = vector.broadcast %cst_38 : f32 to vector<1x128xf32>
    %305 = arith.divf %303, %304 : vector<1x128xf32>
    %306 = vector.extract_strided_slice %41 {offsets = [78, 0], sizes = [1, 128], strides = [1, 1]} : vector<80x128xf32> to vector<1x128xf32>
    %307 = vector.extract_strided_slice %41 {offsets = [6, 0], sizes = [1, 128], strides = [1, 1]} : vector<80x128xf32> to vector<1x128xf32>
    %308 = vector.broadcast %307 : vector<1x128xf32> to vector<16x128xf32>
    %309 = arith.mulf %9, %308 : vector<16x128xf32>
    %310 = vector.broadcast %306 : vector<1x128xf32> to vector<16x128xf32>
    %311 = arith.addf %310, %309 : vector<16x128xf32>
    %312 = vector.extract_strided_slice %41 {offsets = [14, 0], sizes = [1, 128], strides = [1, 1]} : vector<80x128xf32> to vector<1x128xf32>
    %313 = vector.broadcast %312 : vector<1x128xf32> to vector<16x128xf32>
    %314 = arith.mulf %4, %313 : vector<16x128xf32>
    %315 = arith.addf %311, %314 : vector<16x128xf32>
    %316 = vector.extract_strided_slice %41 {offsets = [22, 0], sizes = [1, 128], strides = [1, 1]} : vector<80x128xf32> to vector<1x128xf32>
    %317 = vector.broadcast %316 : vector<1x128xf32> to vector<16x128xf32>
    %318 = arith.mulf %14, %317 : vector<16x128xf32>
    %319 = arith.addf %315, %318 : vector<16x128xf32>
    %320 = vector.extract_strided_slice %41 {offsets = [30, 0], sizes = [1, 128], strides = [1, 1]} : vector<80x128xf32> to vector<1x128xf32>
    %321 = vector.broadcast %320 : vector<1x128xf32> to vector<16x128xf32>
    %322 = arith.mulf %19, %321 : vector<16x128xf32>
    %323 = arith.addf %319, %322 : vector<16x128xf32>
    %324 = vector.extract_strided_slice %41 {offsets = [38, 0], sizes = [1, 128], strides = [1, 1]} : vector<80x128xf32> to vector<1x128xf32>
    %325 = vector.broadcast %324 : vector<1x128xf32> to vector<16x128xf32>
    %326 = arith.mulf %0, %325 : vector<16x128xf32>
    %327 = arith.addf %323, %326 : vector<16x128xf32>
    %328 = vector.extract_strided_slice %41 {offsets = [46, 0], sizes = [1, 128], strides = [1, 1]} : vector<80x128xf32> to vector<1x128xf32>
    %329 = vector.broadcast %328 : vector<1x128xf32> to vector<16x128xf32>
    %330 = arith.mulf %24, %329 : vector<16x128xf32>
    %331 = arith.addf %327, %330 : vector<16x128xf32>
    %332 = vector.extract_strided_slice %41 {offsets = [54, 0], sizes = [1, 128], strides = [1, 1]} : vector<80x128xf32> to vector<1x128xf32>
    %333 = vector.broadcast %332 : vector<1x128xf32> to vector<16x128xf32>
    %334 = arith.mulf %32, %333 : vector<16x128xf32>
    %335 = arith.addf %331, %334 : vector<16x128xf32>
    %336 = vector.extract_strided_slice %41 {offsets = [62, 0], sizes = [1, 128], strides = [1, 1]} : vector<80x128xf32> to vector<1x128xf32>
    %337 = vector.broadcast %336 : vector<1x128xf32> to vector<16x128xf32>
    %338 = arith.mulf %27, %337 : vector<16x128xf32>
    %339 = arith.addf %335, %338 : vector<16x128xf32>
    %340 = vector.extract_strided_slice %41 {offsets = [70, 0], sizes = [1, 128], strides = [1, 1]} : vector<80x128xf32> to vector<1x128xf32>
    %341 = vector.broadcast %340 : vector<1x128xf32> to vector<16x128xf32>
    %342 = arith.mulf %37, %341 : vector<16x128xf32>
    %343 = arith.addf %339, %342 : vector<16x128xf32>
    %cst_39 = arith.constant 0.000000e+00 : f32
    %344 = vector.broadcast %cst_39 : f32 to vector<16x128xf32>
    %345 = arith.maximumf %343, %344 : vector<16x128xf32>
    %cst_40 = arith.constant dense<0.000000e+00> : vector<128xf32>
    %346 = vector.multi_reduction <add>, %345, %cst_40 [0] : vector<16x128xf32> to vector<128xf32>
    %347 = vector.shape_cast %346 : vector<128xf32> to vector<1x128xf32>
    %cst_41 = arith.constant 1.600000e+01 : f32
    %348 = vector.broadcast %cst_41 : f32 to vector<1x128xf32>
    %349 = arith.divf %347, %348 : vector<1x128xf32>
    %350 = vector.extract_strided_slice %41 {offsets = [79, 0], sizes = [1, 128], strides = [1, 1]} : vector<80x128xf32> to vector<1x128xf32>
    %351 = vector.extract_strided_slice %41 {offsets = [7, 0], sizes = [1, 128], strides = [1, 1]} : vector<80x128xf32> to vector<1x128xf32>
    %352 = vector.broadcast %351 : vector<1x128xf32> to vector<16x128xf32>
    %353 = arith.mulf %9, %352 : vector<16x128xf32>
    %354 = vector.broadcast %350 : vector<1x128xf32> to vector<16x128xf32>
    %355 = arith.addf %354, %353 : vector<16x128xf32>
    %356 = vector.extract_strided_slice %41 {offsets = [15, 0], sizes = [1, 128], strides = [1, 1]} : vector<80x128xf32> to vector<1x128xf32>
    %357 = vector.broadcast %356 : vector<1x128xf32> to vector<16x128xf32>
    %358 = arith.mulf %4, %357 : vector<16x128xf32>
    %359 = arith.addf %355, %358 : vector<16x128xf32>
    %360 = vector.extract_strided_slice %41 {offsets = [23, 0], sizes = [1, 128], strides = [1, 1]} : vector<80x128xf32> to vector<1x128xf32>
    %361 = vector.broadcast %360 : vector<1x128xf32> to vector<16x128xf32>
    %362 = arith.mulf %14, %361 : vector<16x128xf32>
    %363 = arith.addf %359, %362 : vector<16x128xf32>
    %364 = vector.extract_strided_slice %41 {offsets = [31, 0], sizes = [1, 128], strides = [1, 1]} : vector<80x128xf32> to vector<1x128xf32>
    %365 = vector.broadcast %364 : vector<1x128xf32> to vector<16x128xf32>
    %366 = arith.mulf %19, %365 : vector<16x128xf32>
    %367 = arith.addf %363, %366 : vector<16x128xf32>
    %368 = vector.extract_strided_slice %41 {offsets = [39, 0], sizes = [1, 128], strides = [1, 1]} : vector<80x128xf32> to vector<1x128xf32>
    %369 = vector.broadcast %368 : vector<1x128xf32> to vector<16x128xf32>
    %370 = arith.mulf %0, %369 : vector<16x128xf32>
    %371 = arith.addf %367, %370 : vector<16x128xf32>
    %372 = vector.extract_strided_slice %41 {offsets = [47, 0], sizes = [1, 128], strides = [1, 1]} : vector<80x128xf32> to vector<1x128xf32>
    %373 = vector.broadcast %372 : vector<1x128xf32> to vector<16x128xf32>
    %374 = arith.mulf %24, %373 : vector<16x128xf32>
    %375 = arith.addf %371, %374 : vector<16x128xf32>
    %376 = vector.extract_strided_slice %41 {offsets = [55, 0], sizes = [1, 128], strides = [1, 1]} : vector<80x128xf32> to vector<1x128xf32>
    %377 = vector.broadcast %376 : vector<1x128xf32> to vector<16x128xf32>
    %378 = arith.mulf %32, %377 : vector<16x128xf32>
    %379 = arith.addf %375, %378 : vector<16x128xf32>
    %380 = vector.extract_strided_slice %41 {offsets = [63, 0], sizes = [1, 128], strides = [1, 1]} : vector<80x128xf32> to vector<1x128xf32>
    %381 = vector.broadcast %380 : vector<1x128xf32> to vector<16x128xf32>
    %382 = arith.mulf %27, %381 : vector<16x128xf32>
    %383 = arith.addf %379, %382 : vector<16x128xf32>
    %384 = vector.extract_strided_slice %41 {offsets = [71, 0], sizes = [1, 128], strides = [1, 1]} : vector<80x128xf32> to vector<1x128xf32>
    %385 = vector.broadcast %384 : vector<1x128xf32> to vector<16x128xf32>
    %386 = arith.mulf %37, %385 : vector<16x128xf32>
    %387 = arith.addf %383, %386 : vector<16x128xf32>
    %cst_42 = arith.constant 0.000000e+00 : f32
    %388 = vector.broadcast %cst_42 : f32 to vector<16x128xf32>
    %389 = arith.maximumf %387, %388 : vector<16x128xf32>
    %cst_43 = arith.constant dense<0.000000e+00> : vector<128xf32>
    %390 = vector.multi_reduction <add>, %389, %cst_43 [0] : vector<16x128xf32> to vector<128xf32>
    %391 = vector.shape_cast %390 : vector<128xf32> to vector<1x128xf32>
    %cst_44 = arith.constant 1.600000e+01 : f32
    %392 = vector.broadcast %cst_44 : f32 to vector<1x128xf32>
    %393 = arith.divf %391, %392 : vector<1x128xf32>
    %394 = tpu.concatenate %85, %129, %173, %217, %261, %305, %349, %393 in 0 : vector<1x128xf32>, vector<1x128xf32>, vector<1x128xf32>, vector<1x128xf32>, vector<1x128xf32>, vector<1x128xf32>, vector<1x128xf32>, vector<1x128xf32> -> vector<8x128xf32>
    %cst_45 = arith.constant dense<0.000000e+00> : vector<8xf32>
    %395 = vector.multi_reduction <add>, %394, %cst_45 [1] : vector<8x128xf32> to vector<8xf32>
    %396 = vector.shape_cast %395 : vector<8xf32> to vector<8x1xf32>
    %c160 = arith.constant 160 : index
    %c0_46 = arith.constant 0 : index
    %397 = vector.load %arg1[%c160, %c0_46] : memref<256x8xf32, #tpu.memory_space<vmem>>, vector<4x8xf32>
    %c168 = arith.constant 168 : index
    %c0_47 = arith.constant 0 : index
    %398 = vector.load %arg1[%c168, %c0_47] : memref<256x8xf32, #tpu.memory_space<vmem>>, vector<4x1xf32>
    %cst_48 = arith.constant dense<0.000000e+00> : vector<4x1xf32>
    %399 = tpu.matmul %397, %396, %cst_48 {dimension_numbers = #tpu.dot_dimension_numbers<[1], [0], [0], [1], [0, 0, 1, 1], [], []>} : vector<4x8xf32>, vector<8x1xf32>, vector<4x1xf32> -> vector<4x1xf32>
    %cst_49 = arith.constant 1.280000e+02 : f32
    %400 = vector.broadcast %cst_49 : f32 to vector<4x1xf32>
    %401 = arith.mulf %400, %398 : vector<4x1xf32>
    %402 = arith.addf %399, %401 : vector<4x1xf32>
    %cst_50 = arith.constant dense<0xFF800000> : vector<1xf32>
    %403 = vector.multi_reduction <maximumf>, %402, %cst_50 [0] : vector<4x1xf32> to vector<1xf32>
    %404 = vector.shape_cast %403 : vector<1xf32> to vector<1x1xf32>
    %405 = tpu.iota {dimensions = array<i32: 0>} : vector<4x1xi32>
    %406 = vector.broadcast %404 : vector<1x1xf32> to vector<4x1xf32>
    %407 = arith.cmpf oeq, %402, %406 : vector<4x1xf32>
    %c4_i32 = arith.constant 4 : i32
    %408 = vector.broadcast %c4_i32 : i32 to vector<4x1xi32>
    %409 = arith.select %407, %405, %408 : vector<4x1xi1>, vector<4x1xi32>
    %cst_51 = arith.constant dense<2147483647> : vector<1xi32>
    %410 = vector.multi_reduction <minsi>, %409, %cst_51 [0] : vector<4x1xi32> to vector<1xi32>
    %411 = vector.shape_cast %410 : vector<1xi32> to vector<1x1xi32>
    %412 = vector.broadcast %411 : vector<1x1xi32> to vector<4x1xi32>
    %413 = arith.cmpi eq, %405, %412 : vector<4x1xi32>
    %414 = arith.extui %413 : vector<4x1xi1> to vector<4x1xi32>
    %415 = arith.sitofp %414 : vector<4x1xi32> to vector<4x1xf32>
    %416 = vector.shape_cast %415 : vector<4x1xf32> to vector<4x1xf32>
    %417 = vector.broadcast %416 : vector<4x1xf32> to vector<4x128xf32>
    %cst_52 = arith.constant dense<0.000000e+00> : vector<80x128xf32>
    %418 = tpu.matmul %38, %417, %cst_52 {dimension_numbers = #tpu.dot_dimension_numbers<[1], [0], [0], [1], [0, 0, 1, 1], [], []>} : vector<80x4xf32>, vector<4x128xf32>, vector<80x128xf32> -> vector<80x128xf32>
    %cst_53 = arith.constant 0.000000e+00 : f32
    %419 = vector.broadcast %cst_53 : f32 to vector<16x8xf32>
    %cst_54 = arith.constant 0.000000e+00 : f32
    %420 = vector.broadcast %cst_54 : f32 to vector<16x1xf32>
    %421 = vector.extract_strided_slice %415 {offsets = [0, 0], sizes = [1, 1], strides = [1, 1]} : vector<4x1xf32> to vector<1x1xf32>
    %c176 = arith.constant 176 : index
    %c0_55 = arith.constant 0 : index
    %422 = vector.load %arg1[%c176, %c0_55] : memref<256x8xf32, #tpu.memory_space<vmem>>, vector<16x8xf32>
    %423 = vector.broadcast %421 : vector<1x1xf32> to vector<16x8xf32>
    %424 = arith.mulf %423, %422 : vector<16x8xf32>
    %425 = arith.addf %419, %424 : vector<16x8xf32>
    %c240 = arith.constant 240 : index
    %c0_56 = arith.constant 0 : index
    %426 = vector.load %arg1[%c240, %c0_56] : memref<256x8xf32, #tpu.memory_space<vmem>>, vector<16x1xf32>
    %427 = vector.broadcast %421 : vector<1x1xf32> to vector<16x1xf32>
    %428 = arith.mulf %427, %426 : vector<16x1xf32>
    %429 = arith.addf %420, %428 : vector<16x1xf32>
    %430 = vector.extract_strided_slice %415 {offsets = [1, 0], sizes = [1, 1], strides = [1, 1]} : vector<4x1xf32> to vector<1x1xf32>
    %c192 = arith.constant 192 : index
    %c0_57 = arith.constant 0 : index
    %431 = vector.load %arg1[%c192, %c0_57] : memref<256x8xf32, #tpu.memory_space<vmem>>, vector<16x8xf32>
    %432 = vector.broadcast %430 : vector<1x1xf32> to vector<16x8xf32>
    %433 = arith.mulf %432, %431 : vector<16x8xf32>
    %434 = arith.addf %425, %433 : vector<16x8xf32>
    %c240_58 = arith.constant 240 : index
    %c1 = arith.constant 1 : index
    %435 = vector.load %arg1[%c240_58, %c1] : memref<256x8xf32, #tpu.memory_space<vmem>>, vector<16x1xf32>
    %436 = vector.broadcast %430 : vector<1x1xf32> to vector<16x1xf32>
    %437 = arith.mulf %436, %435 : vector<16x1xf32>
    %438 = arith.addf %429, %437 : vector<16x1xf32>
    %439 = vector.extract_strided_slice %415 {offsets = [2, 0], sizes = [1, 1], strides = [1, 1]} : vector<4x1xf32> to vector<1x1xf32>
    %c208 = arith.constant 208 : index
    %c0_59 = arith.constant 0 : index
    %440 = vector.load %arg1[%c208, %c0_59] : memref<256x8xf32, #tpu.memory_space<vmem>>, vector<16x8xf32>
    %441 = vector.broadcast %439 : vector<1x1xf32> to vector<16x8xf32>
    %442 = arith.mulf %441, %440 : vector<16x8xf32>
    %443 = arith.addf %434, %442 : vector<16x8xf32>
    %c240_60 = arith.constant 240 : index
    %c2 = arith.constant 2 : index
    %444 = vector.load %arg1[%c240_60, %c2] : memref<256x8xf32, #tpu.memory_space<vmem>>, vector<16x1xf32>
    %445 = vector.broadcast %439 : vector<1x1xf32> to vector<16x1xf32>
    %446 = arith.mulf %445, %444 : vector<16x1xf32>
    %447 = arith.addf %438, %446 : vector<16x1xf32>
    %448 = vector.extract_strided_slice %415 {offsets = [3, 0], sizes = [1, 1], strides = [1, 1]} : vector<4x1xf32> to vector<1x1xf32>
    %c224 = arith.constant 224 : index
    %c0_61 = arith.constant 0 : index
    %449 = vector.load %arg1[%c224, %c0_61] : memref<256x8xf32, #tpu.memory_space<vmem>>, vector<16x8xf32>
    %450 = vector.broadcast %448 : vector<1x1xf32> to vector<16x8xf32>
    %451 = arith.mulf %450, %449 : vector<16x8xf32>
    %452 = arith.addf %443, %451 : vector<16x8xf32>
    %c240_62 = arith.constant 240 : index
    %c3 = arith.constant 3 : index
    %453 = vector.load %arg1[%c240_62, %c3] : memref<256x8xf32, #tpu.memory_space<vmem>>, vector<16x1xf32>
    %454 = vector.broadcast %448 : vector<1x1xf32> to vector<16x1xf32>
    %455 = arith.mulf %454, %453 : vector<16x1xf32>
    %456 = arith.addf %447, %455 : vector<16x1xf32>
    %457 = vector.extract_strided_slice %418 {offsets = [72, 0], sizes = [1, 128], strides = [1, 1]} : vector<80x128xf32> to vector<1x128xf32>
    %458 = vector.extract_strided_slice %418 {offsets = [0, 0], sizes = [1, 128], strides = [1, 1]} : vector<80x128xf32> to vector<1x128xf32>
    %459 = vector.broadcast %458 : vector<1x128xf32> to vector<16x128xf32>
    %460 = arith.mulf %9, %459 : vector<16x128xf32>
    %461 = vector.broadcast %457 : vector<1x128xf32> to vector<16x128xf32>
    %462 = arith.addf %461, %460 : vector<16x128xf32>
    %463 = vector.extract_strided_slice %418 {offsets = [8, 0], sizes = [1, 128], strides = [1, 1]} : vector<80x128xf32> to vector<1x128xf32>
    %464 = vector.broadcast %463 : vector<1x128xf32> to vector<16x128xf32>
    %465 = arith.mulf %4, %464 : vector<16x128xf32>
    %466 = arith.addf %462, %465 : vector<16x128xf32>
    %467 = vector.extract_strided_slice %418 {offsets = [16, 0], sizes = [1, 128], strides = [1, 1]} : vector<80x128xf32> to vector<1x128xf32>
    %468 = vector.broadcast %467 : vector<1x128xf32> to vector<16x128xf32>
    %469 = arith.mulf %14, %468 : vector<16x128xf32>
    %470 = arith.addf %466, %469 : vector<16x128xf32>
    %471 = vector.extract_strided_slice %418 {offsets = [24, 0], sizes = [1, 128], strides = [1, 1]} : vector<80x128xf32> to vector<1x128xf32>
    %472 = vector.broadcast %471 : vector<1x128xf32> to vector<16x128xf32>
    %473 = arith.mulf %19, %472 : vector<16x128xf32>
    %474 = arith.addf %470, %473 : vector<16x128xf32>
    %475 = vector.extract_strided_slice %418 {offsets = [32, 0], sizes = [1, 128], strides = [1, 1]} : vector<80x128xf32> to vector<1x128xf32>
    %476 = vector.broadcast %475 : vector<1x128xf32> to vector<16x128xf32>
    %477 = arith.mulf %0, %476 : vector<16x128xf32>
    %478 = arith.addf %474, %477 : vector<16x128xf32>
    %479 = vector.extract_strided_slice %418 {offsets = [40, 0], sizes = [1, 128], strides = [1, 1]} : vector<80x128xf32> to vector<1x128xf32>
    %480 = vector.broadcast %479 : vector<1x128xf32> to vector<16x128xf32>
    %481 = arith.mulf %24, %480 : vector<16x128xf32>
    %482 = arith.addf %478, %481 : vector<16x128xf32>
    %483 = vector.extract_strided_slice %418 {offsets = [48, 0], sizes = [1, 128], strides = [1, 1]} : vector<80x128xf32> to vector<1x128xf32>
    %484 = vector.broadcast %483 : vector<1x128xf32> to vector<16x128xf32>
    %485 = arith.mulf %32, %484 : vector<16x128xf32>
    %486 = arith.addf %482, %485 : vector<16x128xf32>
    %487 = vector.extract_strided_slice %418 {offsets = [56, 0], sizes = [1, 128], strides = [1, 1]} : vector<80x128xf32> to vector<1x128xf32>
    %488 = vector.broadcast %487 : vector<1x128xf32> to vector<16x128xf32>
    %489 = arith.mulf %27, %488 : vector<16x128xf32>
    %490 = arith.addf %486, %489 : vector<16x128xf32>
    %491 = vector.extract_strided_slice %418 {offsets = [64, 0], sizes = [1, 128], strides = [1, 1]} : vector<80x128xf32> to vector<1x128xf32>
    %492 = vector.broadcast %491 : vector<1x128xf32> to vector<16x128xf32>
    %493 = arith.mulf %37, %492 : vector<16x128xf32>
    %494 = arith.addf %490, %493 : vector<16x128xf32>
    %cst_63 = arith.constant 0.000000e+00 : f32
    %495 = vector.broadcast %cst_63 : f32 to vector<16x128xf32>
    %496 = arith.maximumf %494, %495 : vector<16x128xf32>
    %cst_64 = arith.constant dense<0.000000e+00> : vector<128xf32>
    %497 = vector.multi_reduction <add>, %496, %cst_64 [0] : vector<16x128xf32> to vector<128xf32>
    %498 = vector.shape_cast %497 : vector<128xf32> to vector<1x128xf32>
    %cst_65 = arith.constant 1.600000e+01 : f32
    %499 = vector.broadcast %cst_65 : f32 to vector<1x128xf32>
    %500 = arith.divf %498, %499 : vector<1x128xf32>
    %501 = vector.extract_strided_slice %418 {offsets = [73, 0], sizes = [1, 128], strides = [1, 1]} : vector<80x128xf32> to vector<1x128xf32>
    %502 = vector.extract_strided_slice %418 {offsets = [1, 0], sizes = [1, 128], strides = [1, 1]} : vector<80x128xf32> to vector<1x128xf32>
    %503 = vector.broadcast %502 : vector<1x128xf32> to vector<16x128xf32>
    %504 = arith.mulf %9, %503 : vector<16x128xf32>
    %505 = vector.broadcast %501 : vector<1x128xf32> to vector<16x128xf32>
    %506 = arith.addf %505, %504 : vector<16x128xf32>
    %507 = vector.extract_strided_slice %418 {offsets = [9, 0], sizes = [1, 128], strides = [1, 1]} : vector<80x128xf32> to vector<1x128xf32>
    %508 = vector.broadcast %507 : vector<1x128xf32> to vector<16x128xf32>
    %509 = arith.mulf %4, %508 : vector<16x128xf32>
    %510 = arith.addf %506, %509 : vector<16x128xf32>
    %511 = vector.extract_strided_slice %418 {offsets = [17, 0], sizes = [1, 128], strides = [1, 1]} : vector<80x128xf32> to vector<1x128xf32>
    %512 = vector.broadcast %511 : vector<1x128xf32> to vector<16x128xf32>
    %513 = arith.mulf %14, %512 : vector<16x128xf32>
    %514 = arith.addf %510, %513 : vector<16x128xf32>
    %515 = vector.extract_strided_slice %418 {offsets = [25, 0], sizes = [1, 128], strides = [1, 1]} : vector<80x128xf32> to vector<1x128xf32>
    %516 = vector.broadcast %515 : vector<1x128xf32> to vector<16x128xf32>
    %517 = arith.mulf %19, %516 : vector<16x128xf32>
    %518 = arith.addf %514, %517 : vector<16x128xf32>
    %519 = vector.extract_strided_slice %418 {offsets = [33, 0], sizes = [1, 128], strides = [1, 1]} : vector<80x128xf32> to vector<1x128xf32>
    %520 = vector.broadcast %519 : vector<1x128xf32> to vector<16x128xf32>
    %521 = arith.mulf %0, %520 : vector<16x128xf32>
    %522 = arith.addf %518, %521 : vector<16x128xf32>
    %523 = vector.extract_strided_slice %418 {offsets = [41, 0], sizes = [1, 128], strides = [1, 1]} : vector<80x128xf32> to vector<1x128xf32>
    %524 = vector.broadcast %523 : vector<1x128xf32> to vector<16x128xf32>
    %525 = arith.mulf %24, %524 : vector<16x128xf32>
    %526 = arith.addf %522, %525 : vector<16x128xf32>
    %527 = vector.extract_strided_slice %418 {offsets = [49, 0], sizes = [1, 128], strides = [1, 1]} : vector<80x128xf32> to vector<1x128xf32>
    %528 = vector.broadcast %527 : vector<1x128xf32> to vector<16x128xf32>
    %529 = arith.mulf %32, %528 : vector<16x128xf32>
    %530 = arith.addf %526, %529 : vector<16x128xf32>
    %531 = vector.extract_strided_slice %418 {offsets = [57, 0], sizes = [1, 128], strides = [1, 1]} : vector<80x128xf32> to vector<1x128xf32>
    %532 = vector.broadcast %531 : vector<1x128xf32> to vector<16x128xf32>
    %533 = arith.mulf %27, %532 : vector<16x128xf32>
    %534 = arith.addf %530, %533 : vector<16x128xf32>
    %535 = vector.extract_strided_slice %418 {offsets = [65, 0], sizes = [1, 128], strides = [1, 1]} : vector<80x128xf32> to vector<1x128xf32>
    %536 = vector.broadcast %535 : vector<1x128xf32> to vector<16x128xf32>
    %537 = arith.mulf %37, %536 : vector<16x128xf32>
    %538 = arith.addf %534, %537 : vector<16x128xf32>
    %cst_66 = arith.constant 0.000000e+00 : f32
    %539 = vector.broadcast %cst_66 : f32 to vector<16x128xf32>
    %540 = arith.maximumf %538, %539 : vector<16x128xf32>
    %cst_67 = arith.constant dense<0.000000e+00> : vector<128xf32>
    %541 = vector.multi_reduction <add>, %540, %cst_67 [0] : vector<16x128xf32> to vector<128xf32>
    %542 = vector.shape_cast %541 : vector<128xf32> to vector<1x128xf32>
    %cst_68 = arith.constant 1.600000e+01 : f32
    %543 = vector.broadcast %cst_68 : f32 to vector<1x128xf32>
    %544 = arith.divf %542, %543 : vector<1x128xf32>
    %545 = vector.extract_strided_slice %418 {offsets = [74, 0], sizes = [1, 128], strides = [1, 1]} : vector<80x128xf32> to vector<1x128xf32>
    %546 = vector.extract_strided_slice %418 {offsets = [2, 0], sizes = [1, 128], strides = [1, 1]} : vector<80x128xf32> to vector<1x128xf32>
    %547 = vector.broadcast %546 : vector<1x128xf32> to vector<16x128xf32>
    %548 = arith.mulf %9, %547 : vector<16x128xf32>
    %549 = vector.broadcast %545 : vector<1x128xf32> to vector<16x128xf32>
    %550 = arith.addf %549, %548 : vector<16x128xf32>
    %551 = vector.extract_strided_slice %418 {offsets = [10, 0], sizes = [1, 128], strides = [1, 1]} : vector<80x128xf32> to vector<1x128xf32>
    %552 = vector.broadcast %551 : vector<1x128xf32> to vector<16x128xf32>
    %553 = arith.mulf %4, %552 : vector<16x128xf32>
    %554 = arith.addf %550, %553 : vector<16x128xf32>
    %555 = vector.extract_strided_slice %418 {offsets = [18, 0], sizes = [1, 128], strides = [1, 1]} : vector<80x128xf32> to vector<1x128xf32>
    %556 = vector.broadcast %555 : vector<1x128xf32> to vector<16x128xf32>
    %557 = arith.mulf %14, %556 : vector<16x128xf32>
    %558 = arith.addf %554, %557 : vector<16x128xf32>
    %559 = vector.extract_strided_slice %418 {offsets = [26, 0], sizes = [1, 128], strides = [1, 1]} : vector<80x128xf32> to vector<1x128xf32>
    %560 = vector.broadcast %559 : vector<1x128xf32> to vector<16x128xf32>
    %561 = arith.mulf %19, %560 : vector<16x128xf32>
    %562 = arith.addf %558, %561 : vector<16x128xf32>
    %563 = vector.extract_strided_slice %418 {offsets = [34, 0], sizes = [1, 128], strides = [1, 1]} : vector<80x128xf32> to vector<1x128xf32>
    %564 = vector.broadcast %563 : vector<1x128xf32> to vector<16x128xf32>
    %565 = arith.mulf %0, %564 : vector<16x128xf32>
    %566 = arith.addf %562, %565 : vector<16x128xf32>
    %567 = vector.extract_strided_slice %418 {offsets = [42, 0], sizes = [1, 128], strides = [1, 1]} : vector<80x128xf32> to vector<1x128xf32>
    %568 = vector.broadcast %567 : vector<1x128xf32> to vector<16x128xf32>
    %569 = arith.mulf %24, %568 : vector<16x128xf32>
    %570 = arith.addf %566, %569 : vector<16x128xf32>
    %571 = vector.extract_strided_slice %418 {offsets = [50, 0], sizes = [1, 128], strides = [1, 1]} : vector<80x128xf32> to vector<1x128xf32>
    %572 = vector.broadcast %571 : vector<1x128xf32> to vector<16x128xf32>
    %573 = arith.mulf %32, %572 : vector<16x128xf32>
    %574 = arith.addf %570, %573 : vector<16x128xf32>
    %575 = vector.extract_strided_slice %418 {offsets = [58, 0], sizes = [1, 128], strides = [1, 1]} : vector<80x128xf32> to vector<1x128xf32>
    %576 = vector.broadcast %575 : vector<1x128xf32> to vector<16x128xf32>
    %577 = arith.mulf %27, %576 : vector<16x128xf32>
    %578 = arith.addf %574, %577 : vector<16x128xf32>
    %579 = vector.extract_strided_slice %418 {offsets = [66, 0], sizes = [1, 128], strides = [1, 1]} : vector<80x128xf32> to vector<1x128xf32>
    %580 = vector.broadcast %579 : vector<1x128xf32> to vector<16x128xf32>
    %581 = arith.mulf %37, %580 : vector<16x128xf32>
    %582 = arith.addf %578, %581 : vector<16x128xf32>
    %cst_69 = arith.constant 0.000000e+00 : f32
    %583 = vector.broadcast %cst_69 : f32 to vector<16x128xf32>
    %584 = arith.maximumf %582, %583 : vector<16x128xf32>
    %cst_70 = arith.constant dense<0.000000e+00> : vector<128xf32>
    %585 = vector.multi_reduction <add>, %584, %cst_70 [0] : vector<16x128xf32> to vector<128xf32>
    %586 = vector.shape_cast %585 : vector<128xf32> to vector<1x128xf32>
    %cst_71 = arith.constant 1.600000e+01 : f32
    %587 = vector.broadcast %cst_71 : f32 to vector<1x128xf32>
    %588 = arith.divf %586, %587 : vector<1x128xf32>
    %589 = vector.extract_strided_slice %418 {offsets = [75, 0], sizes = [1, 128], strides = [1, 1]} : vector<80x128xf32> to vector<1x128xf32>
    %590 = vector.extract_strided_slice %418 {offsets = [3, 0], sizes = [1, 128], strides = [1, 1]} : vector<80x128xf32> to vector<1x128xf32>
    %591 = vector.broadcast %590 : vector<1x128xf32> to vector<16x128xf32>
    %592 = arith.mulf %9, %591 : vector<16x128xf32>
    %593 = vector.broadcast %589 : vector<1x128xf32> to vector<16x128xf32>
    %594 = arith.addf %593, %592 : vector<16x128xf32>
    %595 = vector.extract_strided_slice %418 {offsets = [11, 0], sizes = [1, 128], strides = [1, 1]} : vector<80x128xf32> to vector<1x128xf32>
    %596 = vector.broadcast %595 : vector<1x128xf32> to vector<16x128xf32>
    %597 = arith.mulf %4, %596 : vector<16x128xf32>
    %598 = arith.addf %594, %597 : vector<16x128xf32>
    %599 = vector.extract_strided_slice %418 {offsets = [19, 0], sizes = [1, 128], strides = [1, 1]} : vector<80x128xf32> to vector<1x128xf32>
    %600 = vector.broadcast %599 : vector<1x128xf32> to vector<16x128xf32>
    %601 = arith.mulf %14, %600 : vector<16x128xf32>
    %602 = arith.addf %598, %601 : vector<16x128xf32>
    %603 = vector.extract_strided_slice %418 {offsets = [27, 0], sizes = [1, 128], strides = [1, 1]} : vector<80x128xf32> to vector<1x128xf32>
    %604 = vector.broadcast %603 : vector<1x128xf32> to vector<16x128xf32>
    %605 = arith.mulf %19, %604 : vector<16x128xf32>
    %606 = arith.addf %602, %605 : vector<16x128xf32>
    %607 = vector.extract_strided_slice %418 {offsets = [35, 0], sizes = [1, 128], strides = [1, 1]} : vector<80x128xf32> to vector<1x128xf32>
    %608 = vector.broadcast %607 : vector<1x128xf32> to vector<16x128xf32>
    %609 = arith.mulf %0, %608 : vector<16x128xf32>
    %610 = arith.addf %606, %609 : vector<16x128xf32>
    %611 = vector.extract_strided_slice %418 {offsets = [43, 0], sizes = [1, 128], strides = [1, 1]} : vector<80x128xf32> to vector<1x128xf32>
    %612 = vector.broadcast %611 : vector<1x128xf32> to vector<16x128xf32>
    %613 = arith.mulf %24, %612 : vector<16x128xf32>
    %614 = arith.addf %610, %613 : vector<16x128xf32>
    %615 = vector.extract_strided_slice %418 {offsets = [51, 0], sizes = [1, 128], strides = [1, 1]} : vector<80x128xf32> to vector<1x128xf32>
    %616 = vector.broadcast %615 : vector<1x128xf32> to vector<16x128xf32>
    %617 = arith.mulf %32, %616 : vector<16x128xf32>
    %618 = arith.addf %614, %617 : vector<16x128xf32>
    %619 = vector.extract_strided_slice %418 {offsets = [59, 0], sizes = [1, 128], strides = [1, 1]} : vector<80x128xf32> to vector<1x128xf32>
    %620 = vector.broadcast %619 : vector<1x128xf32> to vector<16x128xf32>
    %621 = arith.mulf %27, %620 : vector<16x128xf32>
    %622 = arith.addf %618, %621 : vector<16x128xf32>
    %623 = vector.extract_strided_slice %418 {offsets = [67, 0], sizes = [1, 128], strides = [1, 1]} : vector<80x128xf32> to vector<1x128xf32>
    %624 = vector.broadcast %623 : vector<1x128xf32> to vector<16x128xf32>
    %625 = arith.mulf %37, %624 : vector<16x128xf32>
    %626 = arith.addf %622, %625 : vector<16x128xf32>
    %cst_72 = arith.constant 0.000000e+00 : f32
    %627 = vector.broadcast %cst_72 : f32 to vector<16x128xf32>
    %628 = arith.maximumf %626, %627 : vector<16x128xf32>
    %cst_73 = arith.constant dense<0.000000e+00> : vector<128xf32>
    %629 = vector.multi_reduction <add>, %628, %cst_73 [0] : vector<16x128xf32> to vector<128xf32>
    %630 = vector.shape_cast %629 : vector<128xf32> to vector<1x128xf32>
    %cst_74 = arith.constant 1.600000e+01 : f32
    %631 = vector.broadcast %cst_74 : f32 to vector<1x128xf32>
    %632 = arith.divf %630, %631 : vector<1x128xf32>
    %633 = vector.extract_strided_slice %418 {offsets = [76, 0], sizes = [1, 128], strides = [1, 1]} : vector<80x128xf32> to vector<1x128xf32>
    %634 = vector.extract_strided_slice %418 {offsets = [4, 0], sizes = [1, 128], strides = [1, 1]} : vector<80x128xf32> to vector<1x128xf32>
    %635 = vector.broadcast %634 : vector<1x128xf32> to vector<16x128xf32>
    %636 = arith.mulf %9, %635 : vector<16x128xf32>
    %637 = vector.broadcast %633 : vector<1x128xf32> to vector<16x128xf32>
    %638 = arith.addf %637, %636 : vector<16x128xf32>
    %639 = vector.extract_strided_slice %418 {offsets = [12, 0], sizes = [1, 128], strides = [1, 1]} : vector<80x128xf32> to vector<1x128xf32>
    %640 = vector.broadcast %639 : vector<1x128xf32> to vector<16x128xf32>
    %641 = arith.mulf %4, %640 : vector<16x128xf32>
    %642 = arith.addf %638, %641 : vector<16x128xf32>
    %643 = vector.extract_strided_slice %418 {offsets = [20, 0], sizes = [1, 128], strides = [1, 1]} : vector<80x128xf32> to vector<1x128xf32>
    %644 = vector.broadcast %643 : vector<1x128xf32> to vector<16x128xf32>
    %645 = arith.mulf %14, %644 : vector<16x128xf32>
    %646 = arith.addf %642, %645 : vector<16x128xf32>
    %647 = vector.extract_strided_slice %418 {offsets = [28, 0], sizes = [1, 128], strides = [1, 1]} : vector<80x128xf32> to vector<1x128xf32>
    %648 = vector.broadcast %647 : vector<1x128xf32> to vector<16x128xf32>
    %649 = arith.mulf %19, %648 : vector<16x128xf32>
    %650 = arith.addf %646, %649 : vector<16x128xf32>
    %651 = vector.extract_strided_slice %418 {offsets = [36, 0], sizes = [1, 128], strides = [1, 1]} : vector<80x128xf32> to vector<1x128xf32>
    %652 = vector.broadcast %651 : vector<1x128xf32> to vector<16x128xf32>
    %653 = arith.mulf %0, %652 : vector<16x128xf32>
    %654 = arith.addf %650, %653 : vector<16x128xf32>
    %655 = vector.extract_strided_slice %418 {offsets = [44, 0], sizes = [1, 128], strides = [1, 1]} : vector<80x128xf32> to vector<1x128xf32>
    %656 = vector.broadcast %655 : vector<1x128xf32> to vector<16x128xf32>
    %657 = arith.mulf %24, %656 : vector<16x128xf32>
    %658 = arith.addf %654, %657 : vector<16x128xf32>
    %659 = vector.extract_strided_slice %418 {offsets = [52, 0], sizes = [1, 128], strides = [1, 1]} : vector<80x128xf32> to vector<1x128xf32>
    %660 = vector.broadcast %659 : vector<1x128xf32> to vector<16x128xf32>
    %661 = arith.mulf %32, %660 : vector<16x128xf32>
    %662 = arith.addf %658, %661 : vector<16x128xf32>
    %663 = vector.extract_strided_slice %418 {offsets = [60, 0], sizes = [1, 128], strides = [1, 1]} : vector<80x128xf32> to vector<1x128xf32>
    %664 = vector.broadcast %663 : vector<1x128xf32> to vector<16x128xf32>
    %665 = arith.mulf %27, %664 : vector<16x128xf32>
    %666 = arith.addf %662, %665 : vector<16x128xf32>
    %667 = vector.extract_strided_slice %418 {offsets = [68, 0], sizes = [1, 128], strides = [1, 1]} : vector<80x128xf32> to vector<1x128xf32>
    %668 = vector.broadcast %667 : vector<1x128xf32> to vector<16x128xf32>
    %669 = arith.mulf %37, %668 : vector<16x128xf32>
    %670 = arith.addf %666, %669 : vector<16x128xf32>
    %cst_75 = arith.constant 0.000000e+00 : f32
    %671 = vector.broadcast %cst_75 : f32 to vector<16x128xf32>
    %672 = arith.maximumf %670, %671 : vector<16x128xf32>
    %cst_76 = arith.constant dense<0.000000e+00> : vector<128xf32>
    %673 = vector.multi_reduction <add>, %672, %cst_76 [0] : vector<16x128xf32> to vector<128xf32>
    %674 = vector.shape_cast %673 : vector<128xf32> to vector<1x128xf32>
    %cst_77 = arith.constant 1.600000e+01 : f32
    %675 = vector.broadcast %cst_77 : f32 to vector<1x128xf32>
    %676 = arith.divf %674, %675 : vector<1x128xf32>
    %677 = vector.extract_strided_slice %418 {offsets = [77, 0], sizes = [1, 128], strides = [1, 1]} : vector<80x128xf32> to vector<1x128xf32>
    %678 = vector.extract_strided_slice %418 {offsets = [5, 0], sizes = [1, 128], strides = [1, 1]} : vector<80x128xf32> to vector<1x128xf32>
    %679 = vector.broadcast %678 : vector<1x128xf32> to vector<16x128xf32>
    %680 = arith.mulf %9, %679 : vector<16x128xf32>
    %681 = vector.broadcast %677 : vector<1x128xf32> to vector<16x128xf32>
    %682 = arith.addf %681, %680 : vector<16x128xf32>
    %683 = vector.extract_strided_slice %418 {offsets = [13, 0], sizes = [1, 128], strides = [1, 1]} : vector<80x128xf32> to vector<1x128xf32>
    %684 = vector.broadcast %683 : vector<1x128xf32> to vector<16x128xf32>
    %685 = arith.mulf %4, %684 : vector<16x128xf32>
    %686 = arith.addf %682, %685 : vector<16x128xf32>
    %687 = vector.extract_strided_slice %418 {offsets = [21, 0], sizes = [1, 128], strides = [1, 1]} : vector<80x128xf32> to vector<1x128xf32>
    %688 = vector.broadcast %687 : vector<1x128xf32> to vector<16x128xf32>
    %689 = arith.mulf %14, %688 : vector<16x128xf32>
    %690 = arith.addf %686, %689 : vector<16x128xf32>
    %691 = vector.extract_strided_slice %418 {offsets = [29, 0], sizes = [1, 128], strides = [1, 1]} : vector<80x128xf32> to vector<1x128xf32>
    %692 = vector.broadcast %691 : vector<1x128xf32> to vector<16x128xf32>
    %693 = arith.mulf %19, %692 : vector<16x128xf32>
    %694 = arith.addf %690, %693 : vector<16x128xf32>
    %695 = vector.extract_strided_slice %418 {offsets = [37, 0], sizes = [1, 128], strides = [1, 1]} : vector<80x128xf32> to vector<1x128xf32>
    %696 = vector.broadcast %695 : vector<1x128xf32> to vector<16x128xf32>
    %697 = arith.mulf %0, %696 : vector<16x128xf32>
    %698 = arith.addf %694, %697 : vector<16x128xf32>
    %699 = vector.extract_strided_slice %418 {offsets = [45, 0], sizes = [1, 128], strides = [1, 1]} : vector<80x128xf32> to vector<1x128xf32>
    %700 = vector.broadcast %699 : vector<1x128xf32> to vector<16x128xf32>
    %701 = arith.mulf %24, %700 : vector<16x128xf32>
    %702 = arith.addf %698, %701 : vector<16x128xf32>
    %703 = vector.extract_strided_slice %418 {offsets = [53, 0], sizes = [1, 128], strides = [1, 1]} : vector<80x128xf32> to vector<1x128xf32>
    %704 = vector.broadcast %703 : vector<1x128xf32> to vector<16x128xf32>
    %705 = arith.mulf %32, %704 : vector<16x128xf32>
    %706 = arith.addf %702, %705 : vector<16x128xf32>
    %707 = vector.extract_strided_slice %418 {offsets = [61, 0], sizes = [1, 128], strides = [1, 1]} : vector<80x128xf32> to vector<1x128xf32>
    %708 = vector.broadcast %707 : vector<1x128xf32> to vector<16x128xf32>
    %709 = arith.mulf %27, %708 : vector<16x128xf32>
    %710 = arith.addf %706, %709 : vector<16x128xf32>
    %711 = vector.extract_strided_slice %418 {offsets = [69, 0], sizes = [1, 128], strides = [1, 1]} : vector<80x128xf32> to vector<1x128xf32>
    %712 = vector.broadcast %711 : vector<1x128xf32> to vector<16x128xf32>
    %713 = arith.mulf %37, %712 : vector<16x128xf32>
    %714 = arith.addf %710, %713 : vector<16x128xf32>
    %cst_78 = arith.constant 0.000000e+00 : f32
    %715 = vector.broadcast %cst_78 : f32 to vector<16x128xf32>
    %716 = arith.maximumf %714, %715 : vector<16x128xf32>
    %cst_79 = arith.constant dense<0.000000e+00> : vector<128xf32>
    %717 = vector.multi_reduction <add>, %716, %cst_79 [0] : vector<16x128xf32> to vector<128xf32>
    %718 = vector.shape_cast %717 : vector<128xf32> to vector<1x128xf32>
    %cst_80 = arith.constant 1.600000e+01 : f32
    %719 = vector.broadcast %cst_80 : f32 to vector<1x128xf32>
    %720 = arith.divf %718, %719 : vector<1x128xf32>
    %721 = vector.extract_strided_slice %418 {offsets = [78, 0], sizes = [1, 128], strides = [1, 1]} : vector<80x128xf32> to vector<1x128xf32>
    %722 = vector.extract_strided_slice %418 {offsets = [6, 0], sizes = [1, 128], strides = [1, 1]} : vector<80x128xf32> to vector<1x128xf32>
    %723 = vector.broadcast %722 : vector<1x128xf32> to vector<16x128xf32>
    %724 = arith.mulf %9, %723 : vector<16x128xf32>
    %725 = vector.broadcast %721 : vector<1x128xf32> to vector<16x128xf32>
    %726 = arith.addf %725, %724 : vector<16x128xf32>
    %727 = vector.extract_strided_slice %418 {offsets = [14, 0], sizes = [1, 128], strides = [1, 1]} : vector<80x128xf32> to vector<1x128xf32>
    %728 = vector.broadcast %727 : vector<1x128xf32> to vector<16x128xf32>
    %729 = arith.mulf %4, %728 : vector<16x128xf32>
    %730 = arith.addf %726, %729 : vector<16x128xf32>
    %731 = vector.extract_strided_slice %418 {offsets = [22, 0], sizes = [1, 128], strides = [1, 1]} : vector<80x128xf32> to vector<1x128xf32>
    %732 = vector.broadcast %731 : vector<1x128xf32> to vector<16x128xf32>
    %733 = arith.mulf %14, %732 : vector<16x128xf32>
    %734 = arith.addf %730, %733 : vector<16x128xf32>
    %735 = vector.extract_strided_slice %418 {offsets = [30, 0], sizes = [1, 128], strides = [1, 1]} : vector<80x128xf32> to vector<1x128xf32>
    %736 = vector.broadcast %735 : vector<1x128xf32> to vector<16x128xf32>
    %737 = arith.mulf %19, %736 : vector<16x128xf32>
    %738 = arith.addf %734, %737 : vector<16x128xf32>
    %739 = vector.extract_strided_slice %418 {offsets = [38, 0], sizes = [1, 128], strides = [1, 1]} : vector<80x128xf32> to vector<1x128xf32>
    %740 = vector.broadcast %739 : vector<1x128xf32> to vector<16x128xf32>
    %741 = arith.mulf %0, %740 : vector<16x128xf32>
    %742 = arith.addf %738, %741 : vector<16x128xf32>
    %743 = vector.extract_strided_slice %418 {offsets = [46, 0], sizes = [1, 128], strides = [1, 1]} : vector<80x128xf32> to vector<1x128xf32>
    %744 = vector.broadcast %743 : vector<1x128xf32> to vector<16x128xf32>
    %745 = arith.mulf %24, %744 : vector<16x128xf32>
    %746 = arith.addf %742, %745 : vector<16x128xf32>
    %747 = vector.extract_strided_slice %418 {offsets = [54, 0], sizes = [1, 128], strides = [1, 1]} : vector<80x128xf32> to vector<1x128xf32>
    %748 = vector.broadcast %747 : vector<1x128xf32> to vector<16x128xf32>
    %749 = arith.mulf %32, %748 : vector<16x128xf32>
    %750 = arith.addf %746, %749 : vector<16x128xf32>
    %751 = vector.extract_strided_slice %418 {offsets = [62, 0], sizes = [1, 128], strides = [1, 1]} : vector<80x128xf32> to vector<1x128xf32>
    %752 = vector.broadcast %751 : vector<1x128xf32> to vector<16x128xf32>
    %753 = arith.mulf %27, %752 : vector<16x128xf32>
    %754 = arith.addf %750, %753 : vector<16x128xf32>
    %755 = vector.extract_strided_slice %418 {offsets = [70, 0], sizes = [1, 128], strides = [1, 1]} : vector<80x128xf32> to vector<1x128xf32>
    %756 = vector.broadcast %755 : vector<1x128xf32> to vector<16x128xf32>
    %757 = arith.mulf %37, %756 : vector<16x128xf32>
    %758 = arith.addf %754, %757 : vector<16x128xf32>
    %cst_81 = arith.constant 0.000000e+00 : f32
    %759 = vector.broadcast %cst_81 : f32 to vector<16x128xf32>
    %760 = arith.maximumf %758, %759 : vector<16x128xf32>
    %cst_82 = arith.constant dense<0.000000e+00> : vector<128xf32>
    %761 = vector.multi_reduction <add>, %760, %cst_82 [0] : vector<16x128xf32> to vector<128xf32>
    %762 = vector.shape_cast %761 : vector<128xf32> to vector<1x128xf32>
    %cst_83 = arith.constant 1.600000e+01 : f32
    %763 = vector.broadcast %cst_83 : f32 to vector<1x128xf32>
    %764 = arith.divf %762, %763 : vector<1x128xf32>
    %765 = vector.extract_strided_slice %418 {offsets = [79, 0], sizes = [1, 128], strides = [1, 1]} : vector<80x128xf32> to vector<1x128xf32>
    %766 = vector.extract_strided_slice %418 {offsets = [7, 0], sizes = [1, 128], strides = [1, 1]} : vector<80x128xf32> to vector<1x128xf32>
    %767 = vector.broadcast %766 : vector<1x128xf32> to vector<16x128xf32>
    %768 = arith.mulf %9, %767 : vector<16x128xf32>
    %769 = vector.broadcast %765 : vector<1x128xf32> to vector<16x128xf32>
    %770 = arith.addf %769, %768 : vector<16x128xf32>
    %771 = vector.extract_strided_slice %418 {offsets = [15, 0], sizes = [1, 128], strides = [1, 1]} : vector<80x128xf32> to vector<1x128xf32>
    %772 = vector.broadcast %771 : vector<1x128xf32> to vector<16x128xf32>
    %773 = arith.mulf %4, %772 : vector<16x128xf32>
    %774 = arith.addf %770, %773 : vector<16x128xf32>
    %775 = vector.extract_strided_slice %418 {offsets = [23, 0], sizes = [1, 128], strides = [1, 1]} : vector<80x128xf32> to vector<1x128xf32>
    %776 = vector.broadcast %775 : vector<1x128xf32> to vector<16x128xf32>
    %777 = arith.mulf %14, %776 : vector<16x128xf32>
    %778 = arith.addf %774, %777 : vector<16x128xf32>
    %779 = vector.extract_strided_slice %418 {offsets = [31, 0], sizes = [1, 128], strides = [1, 1]} : vector<80x128xf32> to vector<1x128xf32>
    %780 = vector.broadcast %779 : vector<1x128xf32> to vector<16x128xf32>
    %781 = arith.mulf %19, %780 : vector<16x128xf32>
    %782 = arith.addf %778, %781 : vector<16x128xf32>
    %783 = vector.extract_strided_slice %418 {offsets = [39, 0], sizes = [1, 128], strides = [1, 1]} : vector<80x128xf32> to vector<1x128xf32>
    %784 = vector.broadcast %783 : vector<1x128xf32> to vector<16x128xf32>
    %785 = arith.mulf %0, %784 : vector<16x128xf32>
    %786 = arith.addf %782, %785 : vector<16x128xf32>
    %787 = vector.extract_strided_slice %418 {offsets = [47, 0], sizes = [1, 128], strides = [1, 1]} : vector<80x128xf32> to vector<1x128xf32>
    %788 = vector.broadcast %787 : vector<1x128xf32> to vector<16x128xf32>
    %789 = arith.mulf %24, %788 : vector<16x128xf32>
    %790 = arith.addf %786, %789 : vector<16x128xf32>
    %791 = vector.extract_strided_slice %418 {offsets = [55, 0], sizes = [1, 128], strides = [1, 1]} : vector<80x128xf32> to vector<1x128xf32>
    %792 = vector.broadcast %791 : vector<1x128xf32> to vector<16x128xf32>
    %793 = arith.mulf %32, %792 : vector<16x128xf32>
    %794 = arith.addf %790, %793 : vector<16x128xf32>
    %795 = vector.extract_strided_slice %418 {offsets = [63, 0], sizes = [1, 128], strides = [1, 1]} : vector<80x128xf32> to vector<1x128xf32>
    %796 = vector.broadcast %795 : vector<1x128xf32> to vector<16x128xf32>
    %797 = arith.mulf %27, %796 : vector<16x128xf32>
    %798 = arith.addf %794, %797 : vector<16x128xf32>
    %799 = vector.extract_strided_slice %418 {offsets = [71, 0], sizes = [1, 128], strides = [1, 1]} : vector<80x128xf32> to vector<1x128xf32>
    %800 = vector.broadcast %799 : vector<1x128xf32> to vector<16x128xf32>
    %801 = arith.mulf %37, %800 : vector<16x128xf32>
    %802 = arith.addf %798, %801 : vector<16x128xf32>
    %cst_84 = arith.constant 0.000000e+00 : f32
    %803 = vector.broadcast %cst_84 : f32 to vector<16x128xf32>
    %804 = arith.maximumf %802, %803 : vector<16x128xf32>
    %cst_85 = arith.constant dense<0.000000e+00> : vector<128xf32>
    %805 = vector.multi_reduction <add>, %804, %cst_85 [0] : vector<16x128xf32> to vector<128xf32>
    %806 = vector.shape_cast %805 : vector<128xf32> to vector<1x128xf32>
    %cst_86 = arith.constant 1.600000e+01 : f32
    %807 = vector.broadcast %cst_86 : f32 to vector<1x128xf32>
    %808 = arith.divf %806, %807 : vector<1x128xf32>
    %809 = tpu.concatenate %500, %544, %588, %632, %676, %720, %764, %808 in 0 : vector<1x128xf32>, vector<1x128xf32>, vector<1x128xf32>, vector<1x128xf32>, vector<1x128xf32>, vector<1x128xf32>, vector<1x128xf32>, vector<1x128xf32> -> vector<8x128xf32>
    %cst_87 = arith.constant dense<0.000000e+00> : vector<16x128xf32>
    %810 = tpu.matmul %452, %809, %cst_87 {dimension_numbers = #tpu.dot_dimension_numbers<[1], [0], [0], [1], [0, 0, 1, 1], [], []>} : vector<16x8xf32>, vector<8x128xf32>, vector<16x128xf32> -> vector<16x128xf32>
    %811 = vector.broadcast %456 : vector<16x1xf32> to vector<16x128xf32>
    %812 = arith.addf %810, %811 : vector<16x128xf32>
    %c0_88 = arith.constant 0 : index
    %c0_89 = arith.constant 0 : index
    %813 = vector.load %arg2[%c0_88, %c0_89] : memref<16x128xf32, #tpu.memory_space<vmem>>, vector<16x128xf32>
    tpu.vector_store %arg2[%c0_88, %c0_89], %812 {strides = array<i32>} : memref<16x128xf32, #tpu.memory_space<vmem>>, vector<16x128xf32>,
    return
  }
}

</mosaic_0001>

<llo_original>
// kernel: fwd.1
$region0: #{fwd.1}
  #allocation0 [shape = 'u32[]', space=smem, size = 0x4, offset = 0x4, fixed_abs, tag = 'smem constant byte address 0x4 - core index']
  #allocation1 [shape = 'u32[72,128]{1,0:T(1,128)}', space=vmem, size = 0x9000, scoped, tag = 'internal scratch']
  %s0 = inlined_call_operand.hbm [shape: f32[16,128], index: 0, kind: input, shape index: {}]
  %s1 = inlined_call_operand.hbm [shape: f32[256,8], index: 1, kind: input, shape index: {}]
  %s2 = inlined_call_operand.hbm [shape: f32[16,128], index: 2, kind: output, shape index: {}]
  %s3 = sld [smem:[#allocation0]]
  $region26: #{fwd.1} parent=0
    _
  %s5 = ssub.s32 1, %s3
  %s6 = scalar_select 0, %s5, %s3
  $region1: #{fwd.1} parent=0
    #allocation2 [shape = 'u8[8192]{0}', space=vmem, size = 0x2000, scoped, tag = 'input window, operand 0, single buffered']
    #allocation3 [shape = 's32[1]{0}', space=sflag, size = 0x4, scoped, tag = 'scoped memory for fwd.1']
    #allocation4 [shape = 's32[1]{0}', space=sflag, size = 0x4, scoped, tag = 'scoped memory for fwd.1']
    #allocation5 [shape = 'u8[131072]{0}', space=vmem, size = 0x20000, scoped, tag = 'input window, operand 1, single buffered']
    #allocation6 [shape = 's32[1]{0}', space=sflag, size = 0x4, scoped, tag = 'scoped memory for fwd.1']
    #allocation7 [shape = 'u8[8192]{0}', space=vmem, size = 0x2000, scoped, tag = 'output window, operand 0, single buffered']
    %7 = vsyncpa [#allocation3], 0
    %8 = vsyncpa [#allocation6], 0
    %9 = vsyncpa [#allocation4], 0
    // Predicated region
    $region2: #{fwd.1} parent=1 // pred_check
      _
    $region3: #{fwd.1} parent=1 // pred_check_branch
      %11 = sbr.rel (0) target = $region5
    $region4: #{fwd.1} parent=1 // pred_region
      %13 = vsyncadd [#allocation3], 0
      %s14 = sshll.u32 %s0, 4
      %s15 = int_to_ptr.hbm [resolvable:$true] %s14
      %s16 = sshll.u32 [#allocation2], 4
      %s17 = int_to_ptr.vmem [resolvable:$true] %s16
      %22 = dma.hbm_to_vmem [thread:$0]  %s15, 256, %s17, [#allocation3], 128, 128, 8
    $region5: #{fwd.1} parent=1 // pred_fallthru
      _
    // Predicated region
    $region6: #{fwd.1} parent=1 // pred_check
      _
    $region7: #{fwd.1} parent=1 // pred_check_branch
      %24 = sbr.rel (0) target = $region9
    $region8: #{fwd.1} parent=1 // pred_region
      %26 = vsyncadd [#allocation6], 0
      %s27 = sshll.u32 %s1, 4
      %s28 = int_to_ptr.hbm [resolvable:$true] %s27
      %s29 = sshll.u32 [#allocation5], 4
      %s30 = int_to_ptr.vmem [resolvable:$true] %s29
      %35 = dma.hbm_to_vmem [thread:$0]  %s28, 4096, %s30, [#allocation6], 128, 128, 8
    $region9: #{fwd.1} parent=1 // pred_fallthru
      _
    // Predicated region
    $region10: #{fwd.1} parent=1 // pred_check
      _
    $region11: #{fwd.1} parent=1 // pred_check_branch
      %37 = sbr.rel (0) target = $region13
    $region12: #{fwd.1} parent=1 // pred_region
      %39 = dma.done [#allocation3], 256
    $region13: #{fwd.1} parent=1 // pred_fallthru
      _
    // Predicated region
    $region14: #{fwd.1} parent=1 // pred_check
      _
    $region15: #{fwd.1} parent=1 // pred_check_branch
      %41 = sbr.rel (0) target = $region17
    $region16: #{fwd.1} parent=1 // pred_region
      %43 = dma.done [#allocation6], 4096
    $region17: #{fwd.1} parent=1 // pred_fallthru
      _
    %v44 = vld [vmem:[#allocation2] sm:$0xff]
    %v45 = vld [vmem:[#allocation2 + $0x8] sm:$0xff]
    %v46 = vlaneseq
    %v47 = vand.u32 %v46, 127
    %vm50 = vcmask 1040384
    %v51 = vrot.slane %v44, 7
    %v52 = vrot.slane %v45, 7
    %v53 = vsel %vm50, %v51, %v52
    %v56 = vsel %vm50, 0.0, %v51
    %57 = vrot.lane.b32.xlu0 %v56, 1
    %v58 = vpop.permute.xlu0 %57
    %59 = vrot.lane.b32.xlu0 %v53, 1
    %v60 = vpop.permute.xlu0 %59
    %vm61 = vcmp.ge.s32.totalorder %v47, 1
    %v62 = vsel %vm61, %v58, 0.0
    %v63 = vsel %vm61, %v60, 0.0
    %64 = vrot.lane.b32.xlu0 %v56, 127
    %v65 = vpop.permute.xlu0 %64
    %66 = vrot.lane.b32.xlu0 %v53, 127
    %v67 = vpop.permute.xlu0 %66
    %vm68 = vcmp.lt.s32.totalorder %v47, 127
    %v69 = vsel %vm68, %v65, 0.0
    %v70 = vsel %vm68, %v67, 0.0
    %71 = vrot.lane.b32.xlu0 %v44, 1
    %v72 = vpop.permute.xlu0 %71
    %73 = vrot.lane.b32.xlu0 %v45, 1
    %v74 = vpop.permute.xlu0 %73
    %v75 = vsel %vm61, %v72, 0.0
    %v76 = vsel %vm61, %v74, 0.0
    %77 = vrot.lane.b32.xlu0 %v44, 127
    %v78 = vpop.permute.xlu0 %77
    %79 = vrot.lane.b32.xlu0 %v45, 127
    %v80 = vpop.permute.xlu0 %79
    %v81 = vsel %vm68, %v78, 0.0
    %v82 = vsel %vm68, %v80, 0.0
    %vm83 = vcmask 1046528
    %v84 = vrot.slane %v44, 1
    %v85 = vrot.slane %v45, 1
    %v86 = vsel %vm83, %v84, %v85
    %v89 = vsel %vm83, %v85, 0.0
    %90 = vrot.lane.b32.xlu0 %v86, 1
    %v91 = vpop.permute.xlu0 %90
    %92 = vrot.lane.b32.xlu0 %v89, 1
    %v93 = vpop.permute.xlu0 %92
    %v94 = vsel %vm61, %v91, 0.0
    %v95 = vsel %vm61, %v93, 0.0
    %96 = vrot.lane.b32.xlu0 %v86, 127
    %v97 = vpop.permute.xlu0 %96
    %98 = vrot.lane.b32.xlu0 %v89, 127
    %v99 = vpop.permute.xlu0 %98
    %v100 = vsel %vm68, %v97, 0.0
    %v101 = vsel %vm68, %v99, 0.0
    %v102 = vld [vmem:[#allocation5 + $0x50] sm:$0xff]
    %v103 = vld [vmem:[#allocation5 + $0x58] sm:$0xff]
    %v104 = vld [vmem:[#allocation5 + $0x60] sm:$0xff]
    %v105 = vld [vmem:[#allocation5 + $0x68] sm:$0xff]
    %v106 = vld [vmem:[#allocation5 + $0x70] sm:$0xff]
    %v107 = vld [vmem:[#allocation5 + $0x78] sm:$0xff]
    %v108 = vld [vmem:[#allocation5 + $0x80] sm:$0xff]
    %v109 = vld [vmem:[#allocation5 + $0x88] sm:$0xff]
    %v110 = vld [vmem:[#allocation5 + $0x90] sm:$0xff]
    %v111 = vld [vmem:[#allocation5 + $0x98] sm:$0xff]
    %v112 = vld [vmem:[#allocation5] sm:$0xff]
    %v113 = vld [vmem:[#allocation5 + $0x8] sm:$0xff]
    %v114 = vld [vmem:[#allocation5 + $0x10] sm:$0xff]
    %v115 = vld [vmem:[#allocation5 + $0x18] sm:$0xff]
    %v116 = vld [vmem:[#allocation5 + $0x20] sm:$0xff]
    %v117 = vld [vmem:[#allocation5 + $0x28] sm:$0xff]
    %v118 = vld [vmem:[#allocation5 + $0x30] sm:$0xff]
    %v119 = vld [vmem:[#allocation5 + $0x38] sm:$0xff]
    %v120 = vld [vmem:[#allocation5 + $0x40] sm:$0xff]
    %v121 = vld [vmem:[#allocation5 + $0x48] sm:$0xff]
    %s123 = vtos %v112
    %v124 = vstv %s123
    %v126 = vmul.f32 %v62, %v124
    %v127 = vmul.f32 %v63, %v124
    %s129 = vtos %v121
    %v130 = vstv %s129
    %v132 = vadd.f32 %v130, %v126
    %v133 = vadd.f32 %v130, %v127
    %s135 = vtos %v113
    %v136 = vstv %s135
    %v138 = vmul.f32 %v56, %v136
    %v139 = vmul.f32 %v53, %v136
    %v140 = vadd.f32 %v132, %v138
    %v141 = vadd.f32 %v133, %v139
    %s143 = vtos %v114
    %v144 = vstv %s143
    %v146 = vmul.f32 %v69, %v144
    %v147 = vmul.f32 %v70, %v144
    %v148 = vadd.f32 %v140, %v146
    %v149 = vadd.f32 %v141, %v147
    %s151 = vtos %v115
    %v152 = vstv %s151
    %v154 = vmul.f32 %v75, %v152
    %v155 = vmul.f32 %v76, %v152
    %v156 = vadd.f32 %v148, %v154
    %v157 = vadd.f32 %v149, %v155
    %s159 = vtos %v116
    %v160 = vstv %s159
    %v162 = vmul.f32 %v44, %v160
    %v163 = vmul.f32 %v45, %v160
    %v164 = vadd.f32 %v156, %v162
    %v165 = vadd.f32 %v157, %v163
    %s167 = vtos %v117
    %v168 = vstv %s167
    %v170 = vmul.f32 %v81, %v168
    %v171 = vmul.f32 %v82, %v168
    %v172 = vadd.f32 %v164, %v170
    %v173 = vadd.f32 %v165, %v171
    %s175 = vtos %v118
    %v176 = vstv %s175
    %v178 = vmul.f32 %v94, %v176
    %v179 = vmul.f32 %v95, %v176
    %v180 = vadd.f32 %v172, %v178
    %v181 = vadd.f32 %v173, %v179
    %s183 = vtos %v119
    %v184 = vstv %s183
    %v186 = vmul.f32 %v86, %v184
    %v187 = vmul.f32 %v89, %v184
    %v188 = vadd.f32 %v180, %v186
    %v189 = vadd.f32 %v181, %v187
    %s191 = vtos %v120
    %v192 = vstv %s191
    %v194 = vmul.f32 %v100, %v192
    %v195 = vmul.f32 %v101, %v192
    %v196 = vadd.f32 %v188, %v194
    %v197 = vadd.f32 %v189, %v195
    %v198 = vmax.f32 %v196, 0.0
    %v199 = vmax.f32 %v197, 0.0
    %v200 = vadd.f32 %v198, %v199
    %v201 = vrot.slane %v200, 4
    %v202 = vadd.f32 %v200, %v201
    %v203 = vrot.slane %v202, 2
    %v204 = vadd.f32 %v202, %v203
    %v205 = vrot.slane %v204, 1
    %v206 = vadd.f32 %v204, %v205
    %v207 = vrcp.pop 16.0
    %v208 = vmul.f32 16.0, %v207
    %v209 = vsub.f32 1.0, %v208
    %v210 = vmul.f32 %v207, %v209
    %v211 = vadd.f32 %v207, %v210
    %vm212 = vweird.f32 %v207
    %v213 = vsel %vm212, %v207, %v211
    %v214 = vmul.f32 %v206, %v213
    %v215 = vrot.slane %v112, 1
    %s216 = vtos %v215
    %v217 = vstv %s216
    %v219 = vmul.f32 %v62, %v217
    %v220 = vmul.f32 %v63, %v217
    %v221 = vrot.slane %v121, 1
    %s222 = vtos %v221
    %v223 = vstv %s222
    %v225 = vadd.f32 %v223, %v219
    %v226 = vadd.f32 %v223, %v220
    %v227 = vrot.slane %v113, 1
    %s228 = vtos %v227
    %v229 = vstv %s228
    %v231 = vmul.f32 %v56, %v229
    %v232 = vmul.f32 %v53, %v229
    %v233 = vadd.f32 %v225, %v231
    %v234 = vadd.f32 %v226, %v232
    %v235 = vrot.slane %v114, 1
    %s236 = vtos %v235
    %v237 = vstv %s236
    %v239 = vmul.f32 %v69, %v237
    %v240 = vmul.f32 %v70, %v237
    %v241 = vadd.f32 %v233, %v239
    %v242 = vadd.f32 %v234, %v240
    %v243 = vrot.slane %v115, 1
    %s244 = vtos %v243
    %v245 = vstv %s244
    %v247 = vmul.f32 %v75, %v245
    %v248 = vmul.f32 %v76, %v245
    %v249 = vadd.f32 %v241, %v247
    %v250 = vadd.f32 %v242, %v248
    %v251 = vrot.slane %v116, 1
    %s252 = vtos %v251
    %v253 = vstv %s252
    %v255 = vmul.f32 %v44, %v253
    %v256 = vmul.f32 %v45, %v253
    %v257 = vadd.f32 %v249, %v255
    %v258 = vadd.f32 %v250, %v256
    %v259 = vrot.slane %v117, 1
    %s260 = vtos %v259
    %v261 = vstv %s260
    %v263 = vmul.f32 %v81, %v261
    %v264 = vmul.f32 %v82, %v261
    %v265 = vadd.f32 %v257, %v263
    %v266 = vadd.f32 %v258, %v264
    %v267 = vrot.slane %v118, 1
    %s268 = vtos %v267
    %v269 = vstv %s268
    %v271 = vmul.f32 %v94, %v269
    %v272 = vmul.f32 %v95, %v269
    %v273 = vadd.f32 %v265, %v271
    %v274 = vadd.f32 %v266, %v272
    %v275 = vrot.slane %v119, 1
    %s276 = vtos %v275
    %v277 = vstv %s276
    %v279 = vmul.f32 %v86, %v277
    %v280 = vmul.f32 %v89, %v277
    %v281 = vadd.f32 %v273, %v279
    %v282 = vadd.f32 %v274, %v280
    %v283 = vrot.slane %v120, 1
    %s284 = vtos %v283
    %v285 = vstv %s284
    %v287 = vmul.f32 %v100, %v285
    %v288 = vmul.f32 %v101, %v285
    %v289 = vadd.f32 %v281, %v287
    %v290 = vadd.f32 %v282, %v288
    %v291 = vmax.f32 %v289, 0.0
    %v292 = vmax.f32 %v290, 0.0
    %v293 = vadd.f32 %v291, %v292
    %v294 = vrot.slane %v293, 4
    %v295 = vadd.f32 %v293, %v294
    %v296 = vrot.slane %v295, 2
    %v297 = vadd.f32 %v295, %v296
    %v298 = vrot.slane %v297, 1
    %v299 = vadd.f32 %v297, %v298
    %v300 = vmul.f32 %v299, %v213
    %v301 = vrot.slane %v112, 2
    %s302 = vtos %v301
    %v303 = vstv %s302
    %v305 = vmul.f32 %v62, %v303
    %v306 = vmul.f32 %v63, %v303
    %v307 = vrot.slane %v121, 2
    %s308 = vtos %v307
    %v309 = vstv %s308
    %v311 = vadd.f32 %v309, %v305
    %v312 = vadd.f32 %v309, %v306
    %v313 = vrot.slane %v113, 2
    %s314 = vtos %v313
    %v315 = vstv %s314
    %v317 = vmul.f32 %v56, %v315
    %v318 = vmul.f32 %v53, %v315
    %v319 = vadd.f32 %v311, %v317
    %v320 = vadd.f32 %v312, %v318
    %v321 = vrot.slane %v114, 2
    %s322 = vtos %v321
    %v323 = vstv %s322
    %v325 = vmul.f32 %v69, %v323
    %v326 = vmul.f32 %v70, %v323
    %v327 = vadd.f32 %v319, %v325
    %v328 = vadd.f32 %v320, %v326
    %v329 = vrot.slane %v115, 2
    %s330 = vtos %v329
    %v331 = vstv %s330
    %v333 = vmul.f32 %v75, %v331
    %v334 = vmul.f32 %v76, %v331
    %v335 = vadd.f32 %v327, %v333
    %v336 = vadd.f32 %v328, %v334
    %v337 = vrot.slane %v116, 2
    %s338 = vtos %v337
    %v339 = vstv %s338
    %v341 = vmul.f32 %v44, %v339
    %v342 = vmul.f32 %v45, %v339
    %v343 = vadd.f32 %v335, %v341
    %v344 = vadd.f32 %v336, %v342
    %v345 = vrot.slane %v117, 2
    %s346 = vtos %v345
    %v347 = vstv %s346
    %v349 = vmul.f32 %v81, %v347
    %v350 = vmul.f32 %v82, %v347
    %v351 = vadd.f32 %v343, %v349
    %v352 = vadd.f32 %v344, %v350
    %v353 = vrot.slane %v118, 2
    %s354 = vtos %v353
    %v355 = vstv %s354
    %v357 = vmul.f32 %v94, %v355
    %v358 = vmul.f32 %v95, %v355
    %v359 = vadd.f32 %v351, %v357
    %v360 = vadd.f32 %v352, %v358
    %v361 = vrot.slane %v119, 2
    %s362 = vtos %v361
    %v363 = vstv %s362
    %v365 = vmul.f32 %v86, %v363
    %v366 = vmul.f32 %v89, %v363
    %v367 = vadd.f32 %v359, %v365
    %v368 = vadd.f32 %v360, %v366
    %v369 = vrot.slane %v120, 2
    %s370 = vtos %v369
    %v371 = vstv %s370
    %v373 = vmul.f32 %v100, %v371
    %v374 = vmul.f32 %v101, %v371
    %v375 = vadd.f32 %v367, %v373
    %v376 = vadd.f32 %v368, %v374
    %v377 = vmax.f32 %v375, 0.0
    %v378 = vmax.f32 %v376, 0.0
    %v379 = vadd.f32 %v377, %v378
    %v380 = vrot.slane %v379, 4
    %v381 = vadd.f32 %v379, %v380
    %v382 = vrot.slane %v381, 2
    %v383 = vadd.f32 %v381, %v382
    %v384 = vrot.slane %v383, 1
    %v385 = vadd.f32 %v383, %v384
    %v386 = vmul.f32 %v385, %v213
    %v387 = vrot.slane %v112, 3
    %s388 = vtos %v387
    %v389 = vstv %s388
    %v391 = vmul.f32 %v62, %v389
    %v392 = vmul.f32 %v63, %v389
    %v393 = vrot.slane %v121, 3
    %s394 = vtos %v393
    %v395 = vstv %s394
    %v397 = vadd.f32 %v395, %v391
    %v398 = vadd.f32 %v395, %v392
    %v399 = vrot.slane %v113, 3
    %s400 = vtos %v399
    %v401 = vstv %s400
    %v403 = vmul.f32 %v56, %v401
    %v404 = vmul.f32 %v53, %v401
    %v405 = vadd.f32 %v397, %v403
    %v406 = vadd.f32 %v398, %v404
    %v407 = vrot.slane %v114, 3
    %s408 = vtos %v407
    %v409 = vstv %s408
    %v411 = vmul.f32 %v69, %v409
    %v412 = vmul.f32 %v70, %v409
    %v413 = vadd.f32 %v405, %v411
    %v414 = vadd.f32 %v406, %v412
    %v415 = vrot.slane %v115, 3
    %s416 = vtos %v415
    %v417 = vstv %s416
    %v419 = vmul.f32 %v75, %v417
    %v420 = vmul.f32 %v76, %v417
    %v421 = vadd.f32 %v413, %v419
    %v422 = vadd.f32 %v414, %v420
    %v423 = vrot.slane %v116, 3
    %s424 = vtos %v423
    %v425 = vstv %s424
    %v427 = vmul.f32 %v44, %v425
    %v428 = vmul.f32 %v45, %v425
    %v429 = vadd.f32 %v421, %v427
    %v430 = vadd.f32 %v422, %v428
    %v431 = vrot.slane %v117, 3
    %s432 = vtos %v431
    %v433 = vstv %s432
    %v435 = vmul.f32 %v81, %v433
    %v436 = vmul.f32 %v82, %v433
    %v437 = vadd.f32 %v429, %v435
    %v438 = vadd.f32 %v430, %v436
    %v439 = vrot.slane %v118, 3
    %s440 = vtos %v439
    %v441 = vstv %s440
    %v443 = vmul.f32 %v94, %v441
    %v444 = vmul.f32 %v95, %v441
    %v445 = vadd.f32 %v437, %v443
    %v446 = vadd.f32 %v438, %v444
    %v447 = vrot.slane %v119, 3
    %s448 = vtos %v447
    %v449 = vstv %s448
    %v451 = vmul.f32 %v86, %v449
    %v452 = vmul.f32 %v89, %v449
    %v453 = vadd.f32 %v445, %v451
    %v454 = vadd.f32 %v446, %v452
    %v455 = vrot.slane %v120, 3
    %s456 = vtos %v455
    %v457 = vstv %s456
    %v459 = vmul.f32 %v100, %v457
    %v460 = vmul.f32 %v101, %v457
    %v461 = vadd.f32 %v453, %v459
    %v462 = vadd.f32 %v454, %v460
    %v463 = vmax.f32 %v461, 0.0
    %v464 = vmax.f32 %v462, 0.0
    %v465 = vadd.f32 %v463, %v464
    %v466 = vrot.slane %v465, 4
    %v467 = vadd.f32 %v465, %v466
    %v468 = vrot.slane %v467, 2
    %v469 = vadd.f32 %v467, %v468
    %v470 = vrot.slane %v469, 1
    %v471 = vadd.f32 %v469, %v470
    %v472 = vmul.f32 %v471, %v213
    %v473 = vrot.slane %v112, 4
    %s474 = vtos %v473
    %v475 = vstv %s474
    %v477 = vmul.f32 %v62, %v475
    %v478 = vmul.f32 %v63, %v475
    %v479 = vrot.slane %v121, 4
    %s480 = vtos %v479
    %v481 = vstv %s480
    %v483 = vadd.f32 %v481, %v477
    %v484 = vadd.f32 %v481, %v478
    %v485 = vrot.slane %v113, 4
    %s486 = vtos %v485
    %v487 = vstv %s486
    %v489 = vmul.f32 %v56, %v487
    %v490 = vmul.f32 %v53, %v487
    %v491 = vadd.f32 %v483, %v489
    %v492 = vadd.f32 %v484, %v490
    %v493 = vrot.slane %v114, 4
    %s494 = vtos %v493
    %v495 = vstv %s494
    %v497 = vmul.f32 %v69, %v495
    %v498 = vmul.f32 %v70, %v495
    %v499 = vadd.f32 %v491, %v497
    %v500 = vadd.f32 %v492, %v498
    %v501 = vrot.slane %v115, 4
    %s502 = vtos %v501
    %v503 = vstv %s502
    %v505 = vmul.f32 %v75, %v503
    %v506 = vmul.f32 %v76, %v503
    %v507 = vadd.f32 %v499, %v505
    %v508 = vadd.f32 %v500, %v506
    %v509 = vrot.slane %v116, 4
    %s510 = vtos %v509
    %v511 = vstv %s510
    %v513 = vmul.f32 %v44, %v511
    %v514 = vmul.f32 %v45, %v511
    %v515 = vadd.f32 %v507, %v513
    %v516 = vadd.f32 %v508, %v514
    %v517 = vrot.slane %v117, 4
    %s518 = vtos %v517
    %v519 = vstv %s518
    %v521 = vmul.f32 %v81, %v519
    %v522 = vmul.f32 %v82, %v519
    %v523 = vadd.f32 %v515, %v521
    %v524 = vadd.f32 %v516, %v522
    %v525 = vrot.slane %v118, 4
    %s526 = vtos %v525
    %v527 = vstv %s526
    %v529 = vmul.f32 %v94, %v527
    %v530 = vmul.f32 %v95, %v527
    %v531 = vadd.f32 %v523, %v529
    %v532 = vadd.f32 %v524, %v530
    %v533 = vrot.slane %v119, 4
    %s534 = vtos %v533
    %v535 = vstv %s534
    %v537 = vmul.f32 %v86, %v535
    %v538 = vmul.f32 %v89, %v535
    %v539 = vadd.f32 %v531, %v537
    %v540 = vadd.f32 %v532, %v538
    %v541 = vrot.slane %v120, 4
    %s542 = vtos %v541
    %v543 = vstv %s542
    %v545 = vmul.f32 %v100, %v543
    %v546 = vmul.f32 %v101, %v543
    %v547 = vadd.f32 %v539, %v545
    %v548 = vadd.f32 %v540, %v546
    %v549 = vmax.f32 %v547, 0.0
    %v550 = vmax.f32 %v548, 0.0
    %v551 = vadd.f32 %v549, %v550
    %v552 = vrot.slane %v551, 4
    %v553 = vadd.f32 %v551, %v552
    %v554 = vrot.slane %v553, 2
    %v555 = vadd.f32 %v553, %v554
    %v556 = vrot.slane %v555, 1
    %v557 = vadd.f32 %v555, %v556
    %v558 = vmul.f32 %v557, %v213
    %v559 = vrot.slane %v112, 5
    %s560 = vtos %v559
    %v561 = vstv %s560
    %v563 = vmul.f32 %v62, %v561
    %v564 = vmul.f32 %v63, %v561
    %v565 = vrot.slane %v121, 5
    %s566 = vtos %v565
    %v567 = vstv %s566
    %v569 = vadd.f32 %v567, %v563
    %v570 = vadd.f32 %v567, %v564
    %v571 = vrot.slane %v113, 5
    %s572 = vtos %v571
    %v573 = vstv %s572
    %v575 = vmul.f32 %v56, %v573
    %v576 = vmul.f32 %v53, %v573
    %v577 = vadd.f32 %v569, %v575
    %v578 = vadd.f32 %v570, %v576
    %v579 = vrot.slane %v114, 5
    %s580 = vtos %v579
    %v581 = vstv %s580
    %v583 = vmul.f32 %v69, %v581
    %v584 = vmul.f32 %v70, %v581
    %v585 = vadd.f32 %v577, %v583
    %v586 = vadd.f32 %v578, %v584
    %v587 = vrot.slane %v115, 5
    %s588 = vtos %v587
    %v589 = vstv %s588
    %v591 = vmul.f32 %v75, %v589
    %v592 = vmul.f32 %v76, %v589
    %v593 = vadd.f32 %v585, %v591
    %v594 = vadd.f32 %v586, %v592
    %v595 = vrot.slane %v116, 5
    %s596 = vtos %v595
    %v597 = vstv %s596
    %v599 = vmul.f32 %v44, %v597
    %v600 = vmul.f32 %v45, %v597
    %v601 = vadd.f32 %v593, %v599
    %v602 = vadd.f32 %v594, %v600
    %v603 = vrot.slane %v117, 5
    %s604 = vtos %v603
    %v605 = vstv %s604
    %v607 = vmul.f32 %v81, %v605
    %v608 = vmul.f32 %v82, %v605
    %v609 = vadd.f32 %v601, %v607
    %v610 = vadd.f32 %v602, %v608
    %v611 = vrot.slane %v118, 5
    %s612 = vtos %v611
    %v613 = vstv %s612
    %v615 = vmul.f32 %v94, %v613
    %v616 = vmul.f32 %v95, %v613
    %v617 = vadd.f32 %v609, %v615
    %v618 = vadd.f32 %v610, %v616
    %v619 = vrot.slane %v119, 5
    %s620 = vtos %v619
    %v621 = vstv %s620
    %v623 = vmul.f32 %v86, %v621
    %v624 = vmul.f32 %v89, %v621
    %v625 = vadd.f32 %v617, %v623
    %v626 = vadd.f32 %v618, %v624
    %v627 = vrot.slane %v120, 5
    %s628 = vtos %v627
    %v629 = vstv %s628
    %v631 = vmul.f32 %v100, %v629
    %v632 = vmul.f32 %v101, %v629
    %v633 = vadd.f32 %v625, %v631
    %v634 = vadd.f32 %v626, %v632
    %v635 = vmax.f32 %v633, 0.0
    %v636 = vmax.f32 %v634, 0.0
    %v637 = vadd.f32 %v635, %v636
    %v638 = vrot.slane %v637, 4
    %v639 = vadd.f32 %v637, %v638
    %v640 = vrot.slane %v639, 2
    %v641 = vadd.f32 %v639, %v640
    %v642 = vrot.slane %v641, 1
    %v643 = vadd.f32 %v641, %v642
    %v644 = vmul.f32 %v643, %v213
    %v645 = vrot.slane %v112, 6
    %s646 = vtos %v645
    %v647 = vstv %s646
    %v649 = vmul.f32 %v62, %v647
    %v650 = vmul.f32 %v63, %v647
    %v651 = vrot.slane %v121, 6
    %s652 = vtos %v651
    %v653 = vstv %s652
    %v655 = vadd.f32 %v653, %v649
    %v656 = vadd.f32 %v653, %v650
    %v657 = vrot.slane %v113, 6
    %s658 = vtos %v657
    %v659 = vstv %s658
    %v661 = vmul.f32 %v56, %v659
    %v662 = vmul.f32 %v53, %v659
    %v663 = vadd.f32 %v655, %v661
    %v664 = vadd.f32 %v656, %v662
    %v665 = vrot.slane %v114, 6
    %s666 = vtos %v665
    %v667 = vstv %s666
    %v669 = vmul.f32 %v69, %v667
    %v670 = vmul.f32 %v70, %v667
    %v671 = vadd.f32 %v663, %v669
    %v672 = vadd.f32 %v664, %v670
    %v673 = vrot.slane %v115, 6
    %s674 = vtos %v673
    %v675 = vstv %s674
    %v677 = vmul.f32 %v75, %v675
    %v678 = vmul.f32 %v76, %v675
    %v679 = vadd.f32 %v671, %v677
    %v680 = vadd.f32 %v672, %v678
    %v681 = vrot.slane %v116, 6
    %s682 = vtos %v681
    %v683 = vstv %s682
    %v685 = vmul.f32 %v44, %v683
    %v686 = vmul.f32 %v45, %v683
    %v687 = vadd.f32 %v679, %v685
    %v688 = vadd.f32 %v680, %v686
    %v689 = vrot.slane %v117, 6
    %s690 = vtos %v689
    %v691 = vstv %s690
    %v693 = vmul.f32 %v81, %v691
    %v694 = vmul.f32 %v82, %v691
    %v695 = vadd.f32 %v687, %v693
    %v696 = vadd.f32 %v688, %v694
    %v697 = vrot.slane %v118, 6
    %s698 = vtos %v697
    %v699 = vstv %s698
    %v701 = vmul.f32 %v94, %v699
    %v702 = vmul.f32 %v95, %v699
    %v703 = vadd.f32 %v695, %v701
    %v704 = vadd.f32 %v696, %v702
    %v705 = vrot.slane %v119, 6
    %s706 = vtos %v705
    %v707 = vstv %s706
    %v709 = vmul.f32 %v86, %v707
    %v710 = vmul.f32 %v89, %v707
    %v711 = vadd.f32 %v703, %v709
    %v712 = vadd.f32 %v704, %v710
    %v713 = vrot.slane %v120, 6
    %s714 = vtos %v713
    %v715 = vstv %s714
    %v717 = vmul.f32 %v100, %v715
    %v718 = vmul.f32 %v101, %v715
    %v719 = vadd.f32 %v711, %v717
    %v720 = vadd.f32 %v712, %v718
    %v721 = vmax.f32 %v719, 0.0
    %v722 = vmax.f32 %v720, 0.0
    %v723 = vadd.f32 %v721, %v722
    %v724 = vrot.slane %v723, 4
    %v725 = vadd.f32 %v723, %v724
    %v726 = vrot.slane %v725, 2
    %v727 = vadd.f32 %v725, %v726
    %v728 = vrot.slane %v727, 1
    %v729 = vadd.f32 %v727, %v728
    %v730 = vmul.f32 %v729, %v213
    %v731 = vrot.slane %v112, 7
    %s732 = vtos %v731
    %v733 = vstv %s732
    %v735 = vmul.f32 %v62, %v733
    %v736 = vmul.f32 %v63, %v733
    %v737 = vrot.slane %v121, 7
    %s738 = vtos %v737
    %v739 = vstv %s738
    %v741 = vadd.f32 %v739, %v735
    %v742 = vadd.f32 %v739, %v736
    %v743 = vrot.slane %v113, 7
    %s744 = vtos %v743
    %v745 = vstv %s744
    %v747 = vmul.f32 %v56, %v745
    %v748 = vmul.f32 %v53, %v745
    %v749 = vadd.f32 %v741, %v747
    %v750 = vadd.f32 %v742, %v748
    %v751 = vrot.slane %v114, 7
    %s752 = vtos %v751
    %v753 = vstv %s752
    %v755 = vmul.f32 %v69, %v753
    %v756 = vmul.f32 %v70, %v753
    %v757 = vadd.f32 %v749, %v755
    %v758 = vadd.f32 %v750, %v756
    %v759 = vrot.slane %v115, 7
    %s760 = vtos %v759
    %v761 = vstv %s760
    %v763 = vmul.f32 %v75, %v761
    %v764 = vmul.f32 %v76, %v761
    %v765 = vadd.f32 %v757, %v763
    %v766 = vadd.f32 %v758, %v764
    %v767 = vrot.slane %v116, 7
    %s768 = vtos %v767
    %v769 = vstv %s768
    %v771 = vmul.f32 %v44, %v769
    %v772 = vmul.f32 %v45, %v769
    %v773 = vadd.f32 %v765, %v771
    %v774 = vadd.f32 %v766, %v772
    %v775 = vrot.slane %v117, 7
    %s776 = vtos %v775
    %v777 = vstv %s776
    %v779 = vmul.f32 %v81, %v777
    %v780 = vmul.f32 %v82, %v777
    %v781 = vadd.f32 %v773, %v779
    %v782 = vadd.f32 %v774, %v780
    %v783 = vrot.slane %v118, 7
    %s784 = vtos %v783
    %v785 = vstv %s784
    %v787 = vmul.f32 %v94, %v785
    %v788 = vmul.f32 %v95, %v785
    %v789 = vadd.f32 %v781, %v787
    %v790 = vadd.f32 %v782, %v788
    %v791 = vrot.slane %v119, 7
    %s792 = vtos %v791
    %v793 = vstv %s792
    %v795 = vmul.f32 %v86, %v793
    %v796 = vmul.f32 %v89, %v793
    %v797 = vadd.f32 %v789, %v795
    %v798 = vadd.f32 %v790, %v796
    %v799 = vrot.slane %v120, 7
    %s800 = vtos %v799
    %v801 = vstv %s800
    %v803 = vmul.f32 %v100, %v801
    %v804 = vmul.f32 %v101, %v801
    %v805 = vadd.f32 %v797, %v803
    %v806 = vadd.f32 %v798, %v804
    %v807 = vmax.f32 %v805, 0.0
    %v808 = vmax.f32 %v806, 0.0
    %v809 = vadd.f32 %v807, %v808
    %v810 = vrot.slane %v809, 4
    %v811 = vadd.f32 %v809, %v810
    %v812 = vrot.slane %v811, 2
    %v813 = vadd.f32 %v811, %v812
    %v814 = vrot.slane %v813, 1
    %v815 = vadd.f32 %v813, %v814
    %v816 = vmul.f32 %v815, %v213
    %v817 = vsel %vm50, %v214, %v300
    %vm818 = vcmask 1041408
    %v819 = vsel %vm818, %v817, %v386
    %vm820 = vcmask 1042432
    %v821 = vsel %vm820, %v819, %v472
    %vm822 = vcmask 1043456
    %v823 = vsel %vm822, %v821, %v558
    %vm824 = vcmask 1044480
    %v825 = vsel %vm824, %v823, %v644
    %vm826 = vcmask 1045504
    %v827 = vsel %vm826, %v825, %v730
    %v828 = vsel %vm83, %v827, %v816
    %829 = vadd.xlane.f32.xlu0 %v828
    %v830 = vpop.xlane.xlu0 %829
    %v831 = vld [vmem:[#allocation5 + $0xa0] sm:$0xf]
    %v832 = vld [vmem:[#allocation5 + $0xa8] sm:$0xf]
    %v833 = vmul.f32 %v832, 128.0
    %vm834 = vcmask 64512
    %v836 = vsel %vm834, %v831, 0
    %838 = vmatpush.msra.mxu0 0.0
    %839 = vmatpush.msra.mxu0 0.0
    %840 = vmatpush.msra.mxu0 0.0
    %841 = vmatpush.msra.mxu0 0.0
    %842 = vmatpush.msra.mxu0 0.0
    %843 = vmatpush.msra.mxu0 0.0
    %844 = vmatpush.msra.mxu0 0.0
    %845 = vmatpush.msra.mxu0 0.0
    %846 = vmatpush.msra.mxu0 0.0
    %847 = vmatpush.msra.mxu0 0.0
    %848 = vmatpush.msra.mxu0 0.0
    %849 = vmatpush.msra.mxu0 0.0
    %850 = vmatpush.msra.mxu0 0.0
    %851 = vmatpush.msra.mxu0 0.0
    %852 = vmatpush.msra.mxu0 0.0
    %853 = vmatpush.msra.mxu0 %v830
    %854 = vmatmul.f32.gmra.mxu0 %v836
    %v855 = vpop.f32.mrf.mxu0
    %v856 = vadd.f32 %v833, %v855
    %857 = vdwg.mxu0
    %vm858 = vcmask 3072
    %v859 = vsel %vm858, %v856, -inf
    %v860 = vrot.slane %v859, 4
    %v861 = vmax.f32 %v859, %v860
    %v862 = vrot.slane %v861, 2
    %v863 = vmax.f32 %v861, %v862
    %v864 = vrot.slane %v863, 1
    %v865 = vmax.f32 %v863, %v864
    %v866 = vlaneseq
    %v867 = vshrl.u32 %v866, 7
    %vm868 = vcmp.eq.f32.partialorder %v856, %v865
    %v869 = vsel %vm868, %v867, 4
    %v870 = vsel %vm858, %v869, 2147483647
    %v871 = vrot.slane %v870, 4
    %vm872 = vcmp.lt.s32.totalorder %v870, %v871
    %v873 = vsel %vm872, %v870, %v871
    %v874 = vrot.slane %v873, 2
    %vm875 = vcmp.lt.s32.totalorder %v873, %v874
    %v876 = vsel %vm875, %v873, %v874
    %v877 = vrot.slane %v876, 1
    %vm878 = vcmp.lt.s32.totalorder %v876, %v877
    %v879 = vsel %vm878, %v876, %v877
    %vm880 = vcmp.eq.s32.totalorder %v867, %v879
    %v881 = vsel %vm880, 1, 0
    %v882 = vcvt.s32.f32 %v881
    %884 = vset.pattern.permute.xlu0 0
    %885 = vperm.xlu0 %884, %v882
    %v886 = vpop.permute.xlu0 %885
    %vm887 = vcmask 31744
    %v889 = vsel %vm887, %v102, 0
    %v892 = vsel %vm887, %v103, 0
    %v895 = vsel %vm887, %v104, 0
    %v898 = vsel %vm887, %v105, 0
    %v901 = vsel %vm887, %v106, 0
    %v904 = vsel %vm887, %v107, 0
    %v907 = vsel %vm887, %v108, 0
    %v910 = vsel %vm887, %v109, 0
    %v913 = vsel %vm887, %v110, 0
    %v916 = vsel %vm887, %v111, 0
    %v918 = vsel %vm822, %v886, 0
    %920 = vmatpush.msra.mxu0 0.0
    %921 = vmatpush.msra.mxu0 0.0
    %922 = vmatpush.msra.mxu0 0.0
    %923 = vmatpush.msra.mxu0 0.0
    %924 = vmatpush.msra.mxu0 0.0
    %925 = vmatpush.msra.mxu0 0.0
    %926 = vmatpush.msra.mxu0 0.0
    %927 = vmatpush.msra.mxu0 0.0
    %928 = vmatpush.msra.mxu0 0.0
    %929 = vmatpush.msra.mxu0 0.0
    %930 = vmatpush.msra.mxu0 0.0
    %931 = vmatpush.msra.mxu0 0.0
    %932 = vmatpush.msra.mxu0 0.0
    %933 = vmatpush.msra.mxu0 0.0
    %934 = vmatpush.msra.mxu0 0.0
    %935 = vmatpush.msra.mxu0 %v918
    %936 = vmatmul.f32.gmra.mxu0 %v889
    %v937 = vpop.f32.mrf.mxu0
    %v938 = vadd.f32 0.0, %v937
    %939 = vmatmul.f32.gmra.mxu0 %v892
    %v940 = vpop.f32.mrf.mxu0
    %v941 = vadd.f32 0.0, %v940
    %942 = vmatmul.f32.gmra.mxu0 %v895
    %v943 = vpop.f32.mrf.mxu0
    %v944 = vadd.f32 0.0, %v943
    %945 = vmatmul.f32.gmra.mxu0 %v898
    %v946 = vpop.f32.mrf.mxu0
    %v947 = vadd.f32 0.0, %v946
    %948 = vmatmul.f32.gmra.mxu0 %v901
    %v949 = vpop.f32.mrf.mxu0
    %v950 = vadd.f32 0.0, %v949
    %951 = vmatmul.f32.gmra.mxu0 %v904
    %v952 = vpop.f32.mrf.mxu0
    %v953 = vadd.f32 0.0, %v952
    %954 = vmatmul.f32.gmra.mxu0 %v907
    %v955 = vpop.f32.mrf.mxu0
    %v956 = vadd.f32 0.0, %v955
    %957 = vmatmul.f32.gmra.mxu0 %v910
    %v958 = vpop.f32.mrf.mxu0
    %v959 = vadd.f32 0.0, %v958
    %960 = vmatmul.f32.gmra.mxu0 %v913
    %v961 = vpop.f32.mrf.mxu0
    %v962 = vadd.f32 0.0, %v961
    %963 = vmatmul.f32.gmra.mxu0 %v916
    %v964 = vpop.f32.mrf.mxu0
    %v965 = vadd.f32 0.0, %v964
    %966 = vdwg.mxu0
    %v967 = vld [vmem:[#allocation5 + $0xb0] sm:$0xff]
    %v968 = vld [vmem:[#allocation5 + $0xb8] sm:$0xff]
    %s969 = vtos %v882
    %v970 = vstv %s969
    %v972 = vmul.f32 %v970, %v967
    %v973 = vmul.f32 %v970, %v968
    %v974 = vadd.f32 %v972, 0.0
    %v975 = vadd.f32 %v973, 0.0
    %v976 = vld [vmem:[#allocation5 + $0xf0] sm:$0xff]
    %v977 = vld [vmem:[#allocation5 + $0xf8] sm:$0xff]
    %v978 = vperm.slane %v882, 0
    %v979 = vmul.f32 %v978, %v976
    %v980 = vmul.f32 %v978, %v977
    %v981 = vadd.f32 %v979, 0.0
    %v982 = vadd.f32 %v980, 0.0
    %v983 = vld [vmem:[#allocation5 + $0xc0] sm:$0xff]
    %v984 = vld [vmem:[#allocation5 + $0xc8] sm:$0xff]
    %v985 = vrot.slane %v882, 1
    %s986 = vtos %v985
    %v987 = vstv %s986
    %v989 = vmul.f32 %v987, %v983
    %v990 = vmul.f32 %v987, %v984
    %v991 = vadd.f32 %v974, %v989
    %v992 = vadd.f32 %v975, %v990
    %v993 = vperm.slane %v882, 1
    %996 = vrot.lane.b32.xlu0 %v976, 127
    %v997 = vpop.permute.xlu0 %996
    %998 = vrot.lane.b32.xlu0 %v977, 127
    %v999 = vpop.permute.xlu0 %998
    %v1002 = vmul.f32 %v993, %v997
    %v1003 = vmul.f32 %v993, %v999
    %v1004 = vadd.f32 %v981, %v1002
    %v1005 = vadd.f32 %v982, %v1003
    %v1006 = vld [vmem:[#allocation5 + $0xd0] sm:$0xff]
    %v1007 = vld [vmem:[#allocation5 + $0xd8] sm:$0xff]
    %v1008 = vrot.slane %v882, 2
    %s1009 = vtos %v1008
    %v1010 = vstv %s1009
    %v1012 = vmul.f32 %v1010, %v1006
    %v1013 = vmul.f32 %v1010, %v1007
    %v1014 = vadd.f32 %v991, %v1012
    %v1015 = vadd.f32 %v992, %v1013
    %v1016 = vperm.slane %v882, 2
    %1017 = vrot.lane.b32.xlu0 %v976, 126
    %v1018 = vpop.permute.xlu0 %1017
    %1019 = vrot.lane.b32.xlu0 %v977, 126
    %v1020 = vpop.permute.xlu0 %1019
    %v1023 = vmul.f32 %v1016, %v1018
    %v1024 = vmul.f32 %v1016, %v1020
    %v1025 = vadd.f32 %v1004, %v1023
    %v1026 = vadd.f32 %v1005, %v1024
    %v1027 = vld [vmem:[#allocation5 + $0xe0] sm:$0xff]
    %v1028 = vld [vmem:[#allocation5 + $0xe8] sm:$0xff]
    %v1029 = vrot.slane %v882, 3
    %s1030 = vtos %v1029
    %v1031 = vstv %s1030
    %v1033 = vmul.f32 %v1031, %v1027
    %v1034 = vmul.f32 %v1031, %v1028
    %v1035 = vadd.f32 %v1014, %v1033
    %v1036 = vadd.f32 %v1015, %v1034
    %v1037 = vperm.slane %v882, 3
    %1038 = vrot.lane.b32.xlu0 %v976, 125
    %v1039 = vpop.permute.xlu0 %1038
    %1040 = vrot.lane.b32.xlu0 %v977, 125
    %v1041 = vpop.permute.xlu0 %1040
    %v1044 = vmul.f32 %v1037, %v1039
    %v1045 = vmul.f32 %v1037, %v1041
    %v1046 = vadd.f32 %v1025, %v1044
    %v1047 = vadd.f32 %v1026, %v1045
    %v1048 = vperm.slane %v938, 0
    %v1049 = vmul.f32 %v62, %v1048
    %v1050 = vmul.f32 %v63, %v1048
    %v1051 = vperm.slane %v965, 0
    %v1052 = vadd.f32 %v1051, %v1049
    %v1053 = vadd.f32 %v1051, %v1050
    %v1054 = vperm.slane %v941, 0
    %v1055 = vmul.f32 %v56, %v1054
    %v1056 = vmul.f32 %v53, %v1054
    %v1057 = vadd.f32 %v1052, %v1055
    %v1058 = vadd.f32 %v1053, %v1056
    %v1059 = vperm.slane %v944, 0
    %v1060 = vmul.f32 %v69, %v1059
    %v1061 = vmul.f32 %v70, %v1059
    %v1062 = vadd.f32 %v1057, %v1060
    %v1063 = vadd.f32 %v1058, %v1061
    %v1064 = vperm.slane %v947, 0
    %v1065 = vmul.f32 %v75, %v1064
    %v1066 = vmul.f32 %v76, %v1064
    %v1067 = vadd.f32 %v1062, %v1065
    %v1068 = vadd.f32 %v1063, %v1066
    %v1069 = vperm.slane %v950, 0
    %v1070 = vmul.f32 %v44, %v1069
    %v1071 = vmul.f32 %v45, %v1069
    %v1072 = vadd.f32 %v1067, %v1070
    %v1073 = vadd.f32 %v1068, %v1071
    %v1074 = vperm.slane %v953, 0
    %v1075 = vmul.f32 %v81, %v1074
    %v1076 = vmul.f32 %v82, %v1074
    %v1077 = vadd.f32 %v1072, %v1075
    %v1078 = vadd.f32 %v1073, %v1076
    %v1079 = vperm.slane %v956, 0
    %v1080 = vmul.f32 %v94, %v1079
    %v1081 = vmul.f32 %v95, %v1079
    %v1082 = vadd.f32 %v1077, %v1080
    %v1083 = vadd.f32 %v1078, %v1081
    %v1084 = vperm.slane %v959, 0
    %v1085 = vmul.f32 %v86, %v1084
    %v1086 = vmul.f32 %v89, %v1084
    %v1087 = vadd.f32 %v1082, %v1085
    %v1088 = vadd.f32 %v1083, %v1086
    %v1089 = vperm.slane %v962, 0
    %v1090 = vmul.f32 %v100, %v1089
    %v1091 = vmul.f32 %v101, %v1089
    %v1092 = vadd.f32 %v1087, %v1090
    %v1093 = vadd.f32 %v1088, %v1091
    %v1094 = vmax.f32 %v1092, 0.0
    %v1095 = vmax.f32 %v1093, 0.0
    %v1096 = vadd.f32 %v1094, %v1095
    %v1097 = vrot.slane %v1096, 4
    %v1098 = vadd.f32 %v1096, %v1097
    %v1099 = vrot.slane %v1098, 2
    %v1100 = vadd.f32 %v1098, %v1099
    %v1101 = vrot.slane %v1100, 1
    %v1102 = vadd.f32 %v1100, %v1101
    %v1103 = vmul.f32 %v1102, %v213
    %v1104 = vperm.slane %v938, 1
    %v1105 = vmul.f32 %v62, %v1104
    %v1106 = vmul.f32 %v63, %v1104
    %v1107 = vperm.slane %v965, 1
    %v1108 = vadd.f32 %v1107, %v1105
    %v1109 = vadd.f32 %v1107, %v1106
    %v1110 = vperm.slane %v941, 1
    %v1111 = vmul.f32 %v56, %v1110
    %v1112 = vmul.f32 %v53, %v1110
    %v1113 = vadd.f32 %v1108, %v1111
    %v1114 = vadd.f32 %v1109, %v1112
    %v1115 = vperm.slane %v944, 1
    %v1116 = vmul.f32 %v69, %v1115
    %v1117 = vmul.f32 %v70, %v1115
    %v1118 = vadd.f32 %v1113, %v1116
    %v1119 = vadd.f32 %v1114, %v1117
    %v1120 = vperm.slane %v947, 1
    %v1121 = vmul.f32 %v75, %v1120
    %v1122 = vmul.f32 %v76, %v1120
    %v1123 = vadd.f32 %v1118, %v1121
    %v1124 = vadd.f32 %v1119, %v1122
    %v1125 = vperm.slane %v950, 1
    %v1126 = vmul.f32 %v44, %v1125
    %v1127 = vmul.f32 %v45, %v1125
    %v1128 = vadd.f32 %v1123, %v1126
    %v1129 = vadd.f32 %v1124, %v1127
    %v1130 = vperm.slane %v953, 1
    %v1131 = vmul.f32 %v81, %v1130
    %v1132 = vmul.f32 %v82, %v1130
    %v1133 = vadd.f32 %v1128, %v1131
    %v1134 = vadd.f32 %v1129, %v1132
    %v1135 = vperm.slane %v956, 1
    %v1136 = vmul.f32 %v94, %v1135
    %v1137 = vmul.f32 %v95, %v1135
    %v1138 = vadd.f32 %v1133, %v1136
    %v1139 = vadd.f32 %v1134, %v1137
    %v1140 = vperm.slane %v959, 1
    %v1141 = vmul.f32 %v86, %v1140
    %v1142 = vmul.f32 %v89, %v1140
    %v1143 = vadd.f32 %v1138, %v1141
    %v1144 = vadd.f32 %v1139, %v1142
    %v1145 = vperm.slane %v962, 1
    %v1146 = vmul.f32 %v100, %v1145
    %v1147 = vmul.f32 %v101, %v1145
    %v1148 = vadd.f32 %v1143, %v1146
    %v1149 = vadd.f32 %v1144, %v1147
    %v1150 = vmax.f32 %v1148, 0.0
    %v1151 = vmax.f32 %v1149, 0.0
    %v1152 = vadd.f32 %v1150, %v1151
    %v1153 = vrot.slane %v1152, 4
    %v1154 = vadd.f32 %v1152, %v1153
    %v1155 = vrot.slane %v1154, 2
    %v1156 = vadd.f32 %v1154, %v1155
    %v1157 = vrot.slane %v1156, 1
    %v1158 = vadd.f32 %v1156, %v1157
    %v1159 = vmul.f32 %v1158, %v213
    %v1160 = vperm.slane %v938, 2
    %v1161 = vmul.f32 %v62, %v1160
    %v1162 = vmul.f32 %v63, %v1160
    %v1163 = vperm.slane %v965, 2
    %v1164 = vadd.f32 %v1163, %v1161
    %v1165 = vadd.f32 %v1163, %v1162
    %v1166 = vperm.slane %v941, 2
    %v1167 = vmul.f32 %v56, %v1166
    %v1168 = vmul.f32 %v53, %v1166
    %v1169 = vadd.f32 %v1164, %v1167
    %v1170 = vadd.f32 %v1165, %v1168
    %v1171 = vperm.slane %v944, 2
    %v1172 = vmul.f32 %v69, %v1171
    %v1173 = vmul.f32 %v70, %v1171
    %v1174 = vadd.f32 %v1169, %v1172
    %v1175 = vadd.f32 %v1170, %v1173
    %v1176 = vperm.slane %v947, 2
    %v1177 = vmul.f32 %v75, %v1176
    %v1178 = vmul.f32 %v76, %v1176
    %v1179 = vadd.f32 %v1174, %v1177
    %v1180 = vadd.f32 %v1175, %v1178
    %v1181 = vperm.slane %v950, 2
    %v1182 = vmul.f32 %v44, %v1181
    %v1183 = vmul.f32 %v45, %v1181
    %v1184 = vadd.f32 %v1179, %v1182
    %v1185 = vadd.f32 %v1180, %v1183
    %v1186 = vperm.slane %v953, 2
    %v1187 = vmul.f32 %v81, %v1186
    %v1188 = vmul.f32 %v82, %v1186
    %v1189 = vadd.f32 %v1184, %v1187
    %v1190 = vadd.f32 %v1185, %v1188
    %v1191 = vperm.slane %v956, 2
    %v1192 = vmul.f32 %v94, %v1191
    %v1193 = vmul.f32 %v95, %v1191
    %v1194 = vadd.f32 %v1189, %v1192
    %v1195 = vadd.f32 %v1190, %v1193
    %v1196 = vperm.slane %v959, 2
    %v1197 = vmul.f32 %v86, %v1196
    %v1198 = vmul.f32 %v89, %v1196
    %v1199 = vadd.f32 %v1194, %v1197
    %v1200 = vadd.f32 %v1195, %v1198
    %v1201 = vperm.slane %v962, 2
    %v1202 = vmul.f32 %v100, %v1201
    %v1203 = vmul.f32 %v101, %v1201
    %v1204 = vadd.f32 %v1199, %v1202
    %v1205 = vadd.f32 %v1200, %v1203
    %v1206 = vmax.f32 %v1204, 0.0
    %v1207 = vmax.f32 %v1205, 0.0
    %v1208 = vadd.f32 %v1206, %v1207
    %v1209 = vrot.slane %v1208, 4
    %v1210 = vadd.f32 %v1208, %v1209
    %v1211 = vrot.slane %v1210, 2
    %v1212 = vadd.f32 %v1210, %v1211
    %v1213 = vrot.slane %v1212, 1
    %v1214 = vadd.f32 %v1212, %v1213
    %v1215 = vmul.f32 %v1214, %v213
    %v1216 = vperm.slane %v938, 3
    %v1217 = vmul.f32 %v62, %v1216
    %v1218 = vmul.f32 %v63, %v1216
    %v1219 = vperm.slane %v965, 3
    %v1220 = vadd.f32 %v1219, %v1217
    %v1221 = vadd.f32 %v1219, %v1218
    %v1222 = vperm.slane %v941, 3
    %v1223 = vmul.f32 %v56, %v1222
    %v1224 = vmul.f32 %v53, %v1222
    %v1225 = vadd.f32 %v1220, %v1223
    %v1226 = vadd.f32 %v1221, %v1224
    %v1227 = vperm.slane %v944, 3
    %v1228 = vmul.f32 %v69, %v1227
    %v1229 = vmul.f32 %v70, %v1227
    %v1230 = vadd.f32 %v1225, %v1228
    %v1231 = vadd.f32 %v1226, %v1229
    %v1232 = vperm.slane %v947, 3
    %v1233 = vmul.f32 %v75, %v1232
    %v1234 = vmul.f32 %v76, %v1232
    %v1235 = vadd.f32 %v1230, %v1233
    %v1236 = vadd.f32 %v1231, %v1234
    %v1237 = vperm.slane %v950, 3
    %v1238 = vmul.f32 %v44, %v1237
    %v1239 = vmul.f32 %v45, %v1237
    %v1240 = vadd.f32 %v1235, %v1238
    %v1241 = vadd.f32 %v1236, %v1239
    %v1242 = vperm.slane %v953, 3
    %v1243 = vmul.f32 %v81, %v1242
    %v1244 = vmul.f32 %v82, %v1242
    %v1245 = vadd.f32 %v1240, %v1243
    %v1246 = vadd.f32 %v1241, %v1244
    %v1247 = vperm.slane %v956, 3
    %v1248 = vmul.f32 %v94, %v1247
    %v1249 = vmul.f32 %v95, %v1247
    %v1250 = vadd.f32 %v1245, %v1248
    %v1251 = vadd.f32 %v1246, %v1249
    %v1252 = vperm.slane %v959, 3
    %v1253 = vmul.f32 %v86, %v1252
    %v1254 = vmul.f32 %v89, %v1252
    %v1255 = vadd.f32 %v1250, %v1253
    %v1256 = vadd.f32 %v1251, %v1254
    %v1257 = vperm.slane %v962, 3
    %v1258 = vmul.f32 %v100, %v1257
    %v1259 = vmul.f32 %v101, %v1257
    %v1260 = vadd.f32 %v1255, %v1258
    %v1261 = vadd.f32 %v1256, %v1259
    %v1262 = vmax.f32 %v1260, 0.0
    %v1263 = vmax.f32 %v1261, 0.0
    %v1264 = vadd.f32 %v1262, %v1263
    %v1265 = vrot.slane %v1264, 4
    %v1266 = vadd.f32 %v1264, %v1265
    %v1267 = vrot.slane %v1266, 2
    %v1268 = vadd.f32 %v1266, %v1267
    %v1269 = vrot.slane %v1268, 1
    %v1270 = vadd.f32 %v1268, %v1269
    %v1271 = vmul.f32 %v1270, %v213
    %v1272 = vperm.slane %v938, 4
    %v1273 = vmul.f32 %v62, %v1272
    %v1274 = vmul.f32 %v63, %v1272
    %v1275 = vperm.slane %v965, 4
    %v1276 = vadd.f32 %v1275, %v1273
    %v1277 = vadd.f32 %v1275, %v1274
    %v1278 = vperm.slane %v941, 4
    %v1279 = vmul.f32 %v56, %v1278
    %v1280 = vmul.f32 %v53, %v1278
    %v1281 = vadd.f32 %v1276, %v1279
    %v1282 = vadd.f32 %v1277, %v1280
    %v1283 = vperm.slane %v944, 4
    %v1284 = vmul.f32 %v69, %v1283
    %v1285 = vmul.f32 %v70, %v1283
    %v1286 = vadd.f32 %v1281, %v1284
    %v1287 = vadd.f32 %v1282, %v1285
    %v1288 = vperm.slane %v947, 4
    %v1289 = vmul.f32 %v75, %v1288
    %v1290 = vmul.f32 %v76, %v1288
    %v1291 = vadd.f32 %v1286, %v1289
    %v1292 = vadd.f32 %v1287, %v1290
    %v1293 = vperm.slane %v950, 4
    %v1294 = vmul.f32 %v44, %v1293
    %v1295 = vmul.f32 %v45, %v1293
    %v1296 = vadd.f32 %v1291, %v1294
    %v1297 = vadd.f32 %v1292, %v1295
    %v1298 = vperm.slane %v953, 4
    %v1299 = vmul.f32 %v81, %v1298
    %v1300 = vmul.f32 %v82, %v1298
    %v1301 = vadd.f32 %v1296, %v1299
    %v1302 = vadd.f32 %v1297, %v1300
    %v1303 = vperm.slane %v956, 4
    %v1304 = vmul.f32 %v94, %v1303
    %v1305 = vmul.f32 %v95, %v1303
    %v1306 = vadd.f32 %v1301, %v1304
    %v1307 = vadd.f32 %v1302, %v1305
    %v1308 = vperm.slane %v959, 4
    %v1309 = vmul.f32 %v86, %v1308
    %v1310 = vmul.f32 %v89, %v1308
    %v1311 = vadd.f32 %v1306, %v1309
    %v1312 = vadd.f32 %v1307, %v1310
    %v1313 = vperm.slane %v962, 4
    %v1314 = vmul.f32 %v100, %v1313
    %v1315 = vmul.f32 %v101, %v1313
    %v1316 = vadd.f32 %v1311, %v1314
    %v1317 = vadd.f32 %v1312, %v1315
    %v1318 = vmax.f32 %v1316, 0.0
    %v1319 = vmax.f32 %v1317, 0.0
    %v1320 = vadd.f32 %v1318, %v1319
    %v1321 = vrot.slane %v1320, 4
    %v1322 = vadd.f32 %v1320, %v1321
    %v1323 = vrot.slane %v1322, 2
    %v1324 = vadd.f32 %v1322, %v1323
    %v1325 = vrot.slane %v1324, 1
    %v1326 = vadd.f32 %v1324, %v1325
    %v1327 = vmul.f32 %v1326, %v213
    %v1328 = vperm.slane %v938, 5
    %v1329 = vmul.f32 %v62, %v1328
    %v1330 = vmul.f32 %v63, %v1328
    %v1331 = vperm.slane %v965, 5
    %v1332 = vadd.f32 %v1331, %v1329
    %v1333 = vadd.f32 %v1331, %v1330
    %v1334 = vperm.slane %v941, 5
    %v1335 = vmul.f32 %v56, %v1334
    %v1336 = vmul.f32 %v53, %v1334
    %v1337 = vadd.f32 %v1332, %v1335
    %v1338 = vadd.f32 %v1333, %v1336
    %v1339 = vperm.slane %v944, 5
    %v1340 = vmul.f32 %v69, %v1339
    %v1341 = vmul.f32 %v70, %v1339
    %v1342 = vadd.f32 %v1337, %v1340
    %v1343 = vadd.f32 %v1338, %v1341
    %v1344 = vperm.slane %v947, 5
    %v1345 = vmul.f32 %v75, %v1344
    %v1346 = vmul.f32 %v76, %v1344
    %v1347 = vadd.f32 %v1342, %v1345
    %v1348 = vadd.f32 %v1343, %v1346
    %v1349 = vperm.slane %v950, 5
    %v1350 = vmul.f32 %v44, %v1349
    %v1351 = vmul.f32 %v45, %v1349
    %v1352 = vadd.f32 %v1347, %v1350
    %v1353 = vadd.f32 %v1348, %v1351
    %v1354 = vperm.slane %v953, 5
    %v1355 = vmul.f32 %v81, %v1354
    %v1356 = vmul.f32 %v82, %v1354
    %v1357 = vadd.f32 %v1352, %v1355
    %v1358 = vadd.f32 %v1353, %v1356
    %v1359 = vperm.slane %v956, 5
    %v1360 = vmul.f32 %v94, %v1359
    %v1361 = vmul.f32 %v95, %v1359
    %v1362 = vadd.f32 %v1357, %v1360
    %v1363 = vadd.f32 %v1358, %v1361
    %v1364 = vperm.slane %v959, 5
    %v1365 = vmul.f32 %v86, %v1364
    %v1366 = vmul.f32 %v89, %v1364
    %v1367 = vadd.f32 %v1362, %v1365
    %v1368 = vadd.f32 %v1363, %v1366
    %v1369 = vperm.slane %v962, 5
    %v1370 = vmul.f32 %v100, %v1369
    %v1371 = vmul.f32 %v101, %v1369
    %v1372 = vadd.f32 %v1367, %v1370
    %v1373 = vadd.f32 %v1368, %v1371
    %v1374 = vmax.f32 %v1372, 0.0
    %v1375 = vmax.f32 %v1373, 0.0
    %v1376 = vadd.f32 %v1374, %v1375
    %v1377 = vrot.slane %v1376, 4
    %v1378 = vadd.f32 %v1376, %v1377
    %v1379 = vrot.slane %v1378, 2
    %v1380 = vadd.f32 %v1378, %v1379
    %v1381 = vrot.slane %v1380, 1
    %v1382 = vadd.f32 %v1380, %v1381
    %v1383 = vmul.f32 %v1382, %v213
    %v1384 = vperm.slane %v938, 6
    %v1385 = vmul.f32 %v62, %v1384
    %v1386 = vmul.f32 %v63, %v1384
    %v1387 = vperm.slane %v965, 6
    %v1388 = vadd.f32 %v1387, %v1385
    %v1389 = vadd.f32 %v1387, %v1386
    %v1390 = vperm.slane %v941, 6
    %v1391 = vmul.f32 %v56, %v1390
    %v1392 = vmul.f32 %v53, %v1390
    %v1393 = vadd.f32 %v1388, %v1391
    %v1394 = vadd.f32 %v1389, %v1392
    %v1395 = vperm.slane %v944, 6
    %v1396 = vmul.f32 %v69, %v1395
    %v1397 = vmul.f32 %v70, %v1395
    %v1398 = vadd.f32 %v1393, %v1396
    %v1399 = vadd.f32 %v1394, %v1397
    %v1400 = vperm.slane %v947, 6
    %v1401 = vmul.f32 %v75, %v1400
    %v1402 = vmul.f32 %v76, %v1400
    %v1403 = vadd.f32 %v1398, %v1401
    %v1404 = vadd.f32 %v1399, %v1402
    %v1405 = vperm.slane %v950, 6
    %v1406 = vmul.f32 %v44, %v1405
    %v1407 = vmul.f32 %v45, %v1405
    %v1408 = vadd.f32 %v1403, %v1406
    %v1409 = vadd.f32 %v1404, %v1407
    %v1410 = vperm.slane %v953, 6
    %v1411 = vmul.f32 %v81, %v1410
    %v1412 = vmul.f32 %v82, %v1410
    %v1413 = vadd.f32 %v1408, %v1411
    %v1414 = vadd.f32 %v1409, %v1412
    %v1415 = vperm.slane %v956, 6
    %v1416 = vmul.f32 %v94, %v1415
    %v1417 = vmul.f32 %v95, %v1415
    %v1418 = vadd.f32 %v1413, %v1416
    %v1419 = vadd.f32 %v1414, %v1417
    %v1420 = vperm.slane %v959, 6
    %v1421 = vmul.f32 %v86, %v1420
    %v1422 = vmul.f32 %v89, %v1420
    %v1423 = vadd.f32 %v1418, %v1421
    %v1424 = vadd.f32 %v1419, %v1422
    %v1425 = vperm.slane %v962, 6
    %v1426 = vmul.f32 %v100, %v1425
    %v1427 = vmul.f32 %v101, %v1425
    %v1428 = vadd.f32 %v1423, %v1426
    %v1429 = vadd.f32 %v1424, %v1427
    %v1430 = vmax.f32 %v1428, 0.0
    %v1431 = vmax.f32 %v1429, 0.0
    %v1432 = vadd.f32 %v1430, %v1431
    %v1433 = vrot.slane %v1432, 4
    %v1434 = vadd.f32 %v1432, %v1433
    %v1435 = vrot.slane %v1434, 2
    %v1436 = vadd.f32 %v1434, %v1435
    %v1437 = vrot.slane %v1436, 1
    %v1438 = vadd.f32 %v1436, %v1437
    %v1439 = vmul.f32 %v1438, %v213
    %v1440 = vperm.slane %v938, 7
    %v1441 = vmul.f32 %v62, %v1440
    %v1442 = vmul.f32 %v63, %v1440
    %v1443 = vperm.slane %v965, 7
    %v1444 = vadd.f32 %v1443, %v1441
    %v1445 = vadd.f32 %v1443, %v1442
    %v1446 = vperm.slane %v941, 7
    %v1447 = vmul.f32 %v56, %v1446
    %v1448 = vmul.f32 %v53, %v1446
    %v1449 = vadd.f32 %v1444, %v1447
    %v1450 = vadd.f32 %v1445, %v1448
    %v1451 = vperm.slane %v944, 7
    %v1452 = vmul.f32 %v69, %v1451
    %v1453 = vmul.f32 %v70, %v1451
    %v1454 = vadd.f32 %v1449, %v1452
    %v1455 = vadd.f32 %v1450, %v1453
    %v1456 = vperm.slane %v947, 7
    %v1457 = vmul.f32 %v75, %v1456
    %v1458 = vmul.f32 %v76, %v1456
    %v1459 = vadd.f32 %v1454, %v1457
    %v1460 = vadd.f32 %v1455, %v1458
    %v1461 = vperm.slane %v950, 7
    %v1462 = vmul.f32 %v44, %v1461
    %v1463 = vmul.f32 %v45, %v1461
    %v1464 = vadd.f32 %v1459, %v1462
    %v1465 = vadd.f32 %v1460, %v1463
    %v1466 = vperm.slane %v953, 7
    %v1467 = vmul.f32 %v81, %v1466
    %v1468 = vmul.f32 %v82, %v1466
    %v1469 = vadd.f32 %v1464, %v1467
    %v1470 = vadd.f32 %v1465, %v1468
    %v1471 = vperm.slane %v956, 7
    %v1472 = vmul.f32 %v94, %v1471
    %v1473 = vmul.f32 %v95, %v1471
    %v1474 = vadd.f32 %v1469, %v1472
    %v1475 = vadd.f32 %v1470, %v1473
    %v1476 = vperm.slane %v959, 7
    %v1477 = vmul.f32 %v86, %v1476
    %v1478 = vmul.f32 %v89, %v1476
    %v1479 = vadd.f32 %v1474, %v1477
    %v1480 = vadd.f32 %v1475, %v1478
    %v1481 = vperm.slane %v962, 7
    %v1482 = vmul.f32 %v100, %v1481
    %v1483 = vmul.f32 %v101, %v1481
    %v1484 = vadd.f32 %v1479, %v1482
    %v1485 = vadd.f32 %v1480, %v1483
    %v1486 = vmax.f32 %v1484, 0.0
    %v1487 = vmax.f32 %v1485, 0.0
    %v1488 = vadd.f32 %v1486, %v1487
    %v1489 = vrot.slane %v1488, 4
    %v1490 = vadd.f32 %v1488, %v1489
    %v1491 = vrot.slane %v1490, 2
    %v1492 = vadd.f32 %v1490, %v1491
    %v1493 = vrot.slane %v1492, 1
    %v1494 = vadd.f32 %v1492, %v1493
    %v1495 = vmul.f32 %v1494, %v213
    %v1496 = vsel %vm50, %v1103, %v1159
    %v1497 = vsel %vm818, %v1496, %v1215
    %v1498 = vsel %vm820, %v1497, %v1271
    %v1499 = vsel %vm822, %v1498, %v1327
    %v1500 = vsel %vm824, %v1499, %v1383
    %v1501 = vsel %vm826, %v1500, %v1439
    %v1502 = vsel %vm83, %v1501, %v1495
    %1504 = vset.pattern.permute.xlu0 0
    %1505 = vperm.xlu0 %1504, %v1046
    %v1506 = vpop.permute.xlu0 %1505
    %1509 = vset.pattern.permute.xlu0 0
    %1510 = vperm.xlu0 %1509, %v1047
    %v1511 = vpop.permute.xlu0 %1510
    %v1514 = vsel %vm834, %v1035, 0
    %v1517 = vsel %vm834, %v1036, 0
    %1519 = vmatpush.msra.mxu0 0.0
    %1520 = vmatpush.msra.mxu0 0.0
    %1521 = vmatpush.msra.mxu0 0.0
    %1522 = vmatpush.msra.mxu0 0.0
    %1523 = vmatpush.msra.mxu0 0.0
    %1524 = vmatpush.msra.mxu0 0.0
    %1525 = vmatpush.msra.mxu0 0.0
    %1526 = vmatpush.msra.mxu0 0.0
    %1527 = vmatpush.msra.mxu0 0.0
    %1528 = vmatpush.msra.mxu0 0.0
    %1529 = vmatpush.msra.mxu0 0.0
    %1530 = vmatpush.msra.mxu0 0.0
    %1531 = vmatpush.msra.mxu0 0.0
    %1532 = vmatpush.msra.mxu0 0.0
    %1533 = vmatpush.msra.mxu0 0.0
    %1534 = vmatpush.msra.mxu0 %v1502
    %1535 = vmatmul.f32.gmra.mxu0 %v1514
    %v1536 = vpop.f32.mrf.mxu0
    %v1537 = vadd.f32 %v1506, %v1536
    %1538 = vmatmul.f32.gmra.mxu0 %v1517
    %v1539 = vpop.f32.mrf.mxu0
    %v1540 = vadd.f32 %v1511, %v1539
    %1541 = vdwg.mxu0
    %1542 = vst [vmem:[#allocation7] sm:$0xff] %v1537
    %1543 = vst [vmem:[#allocation7 + $0x8] sm:$0xff] %v1540
    // Predicated region
    $region18: #{fwd.1} parent=1 // pred_check
      _
    $region19: #{fwd.1} parent=1 // pred_check_branch
      %1545 = sbr.rel (0) target = $region21
    $region20: #{fwd.1} parent=1 // pred_region
      %1547 = vsyncadd [#allocation4], 0
      %s1548 = sshll.u32 [#allocation7], 4
      %s1549 = int_to_ptr.vmem [resolvable:$true] %s1548
      %s1550 = sshll.u32 %s2, 4
      %s1551 = int_to_ptr.hbm [resolvable:$true] %s1550
      %1556 = dma.vmem_to_hbm [thread:$0]  %s1549, 256, %s1551, [#allocation4], 128, 128, 8
    $region21: #{fwd.1} parent=1 // pred_fallthru
      _
    // Predicated region
    $region22: #{fwd.1} parent=1 // pred_check
      _
    $region23: #{fwd.1} parent=1 // pred_check_branch
      %1558 = sbr.rel (0) target = $region25
    $region24: #{fwd.1} parent=1 // pred_region
      %1560 = dma.done [#allocation4], 256
    $region25: #{fwd.1} parent=1 // pred_fallthru
      _
    %1561 = vsyncpa [#allocation3], 1
    %1562 = vsyncpa [#allocation6], 1
    %1563 = vsyncpa [#allocation4], 1

</llo_original>
